<compile_context>
chip_gen: v7x
topology: tpu7x:2x2x1
jax: 0.10.0
libtpu: 0.0.40
codegen_flags: <defaults>
</compile_context>

<pallas_src>
import functools
import math

import jax
import jax.numpy as jnp
import numpy as np
from jax import lax
from jax.experimental import pallas as pl
from jax.experimental.pallas import tpu as pltpu

# ---- module constants (from the PyTorch file) ----
d_Q = 64
d_V = 64
d_model = 256
n_head = 1
d_ff = 256
n_layers = 6
d_feature = 3

NEG_FILL = -1e9


def _round_up(x, m):
    return ((x + m - 1) // m) * m


# =====================================================================
# Flash-style scaled-dot-product attention Pallas kernel
# =====================================================================
def _flash_sdpa_kernel(qpad_ref, kpad_ref, q_ref, k_ref, v_ref, o_ref,
                       m_sc, l_sc, acc_sc, *, scale, causal, tq, tk, pack_out):
    qi = pl.program_id(1)
    ki = pl.program_id(2)

    @pl.when(ki == 0)
    def _init():
        m_sc[...] = jnp.full_like(m_sc, -jnp.inf)
        l_sc[...] = jnp.zeros_like(l_sc)
        acc_sc[...] = jnp.zeros_like(acc_sc)

    def _compute():
        # Fold 1/sqrt(d) into the small resident Q tile instead of the
        # (G, tq, tk) score tile (tk/D fewer VPU multiplies).  scale = 1/8
        # here, exactly representable in bf16.
        q = q_ref[...] * jnp.asarray(scale, q_ref.dtype)
        # (G, tq, D) x (G, tk, D) -> (G, tq, tk): contract last dims (no K
        # transpose on the XLU); f32 accumulation on the MXU.
        s = jnp.einsum("gqd,gkd->gqk", q, k_ref[...],
                       preferred_element_type=jnp.float32)

        # Mask built in-kernel -- no O(Sq*Sk) mask DMA.  Pad flags are tiny
        # (tq,1)/(1,tk) vectors; the causal triangle comes from iota.
        masked = jnp.logical_or(qpad_ref[...] != 0.0, kpad_ref[...] != 0.0)
        if causal:
            q_idx = qi * tq + lax.broadcasted_iota(jnp.int32, (tq, tk), 0)
            k_idx = ki * tk + lax.broadcasted_iota(jnp.int32, (tq, tk), 1)
            masked = jnp.logical_or(masked, (k_idx > q_idx)[None, :, :])
        s = jnp.where(masked, jnp.float32(NEG_FILL), s)

        m_prev = m_sc[...]
        m_new = jnp.maximum(m_prev, jnp.max(s, axis=-1, keepdims=True))
        alpha = jnp.exp(m_prev - m_new)
        p = jnp.exp(s - m_new)
        # PyTorch semantics: the -1e9-filled (masked) entries ARE part of the
        # softmax denominator (their exp underflows to 0 unless the whole row
        # is masked); they are zeroed only in the numerator (the post-softmax
        # masked_fill_(attn_mask, 0)).
        l_sc[...] = alpha * l_sc[...] + jnp.sum(p, axis=-1, keepdims=True)
        p = jnp.where(masked, jnp.float32(0.0), p)
        acc_sc[...] = alpha * acc_sc[...] + jnp.einsum(
            "gqk,gkd->gqd", p.astype(v_ref.dtype), v_ref[...],
            preferred_element_type=jnp.float32)
        m_sc[...] = m_new

    if causal:
        # Skip key blocks entirely above the diagonal: exact (they would only
        # add exp(-1e9 - m) == 0), ~2x less MXU/VPU/EUP work at long Sq.
        @pl.when(ki * tk <= qi * tq + tq - 1)
        def _():
            _compute()
    else:
        _compute()

    @pl.when(ki == pl.num_programs(2) - 1)
    def _finalize():
        inv_l = pl.reciprocal(l_sc[...], approx=False)   # exact divide
        out = acc_sc[...] * inv_l                        # (G, tq, Dv) f32
        if pack_out:
            # Lane-dense store: pack two g-slices along the feature axis so
            # the store block is 2*Dv = 128 lanes wide.  Un-packed again in
            # the wrapper (pure layout plumbing).
            g2 = out.shape[0] // 2
            o_ref[...] = jnp.concatenate([out[:g2], out[g2:]],
                                         axis=-1).astype(o_ref.dtype)
        else:
            o_ref[...] = out.astype(o_ref.dtype)


def scaled_dot_product_attention(Q, K, V, *, q_pad, k_pad, causal, scale=None,
                                 compute_dtype=jnp.bfloat16,
                                 heads_per_step=None, q_block=128,
                                 k_block=1024):
    """Q:[B,H,Sq,D]  K:[B,H,Sk,D]  V:[B,H,Sk,Dv]
    q_pad:[B,Sq] / k_pad:[B,Sk] boolean pad flags (True == masked row/col);
    `causal` adds the k>q upper-triangular mask (decoder self-attention)."""
    B, H, Sq, D = Q.shape
    Sk = K.shape[2]
    Dv = V.shape[3]
    if scale is None:
        scale = 1.0 / math.sqrt(D)
    out_dtype = Q.dtype
    BH = B * H

    # matmul operands in bf16 (half the HBM/DMA bytes, native MXU rate);
    # softmax statistics / accumulation stay f32 inside the kernel.
    q = Q.reshape(BH, Sq, D).astype(compute_dtype)
    k = K.reshape(BH, Sk, D).astype(compute_dtype)
    v = V.reshape(BH, Sk, Dv).astype(compute_dtype)
    qp = jnp.broadcast_to(q_pad[:, None, :], (B, H, Sq)).reshape(BH, Sq)
    kp = jnp.broadcast_to(k_pad[:, None, :], (B, H, Sk)).reshape(BH, Sk)
    qp = qp.astype(jnp.float32)
    kp = kp.astype(jnp.float32)

    # ---- tile / group selection ----
    tq = min(q_block, _round_up(Sq, 8))          # sublane-aligned q tiles
    tk = min(k_block, _round_up(Sk, 128))        # lane-aligned k tiles
    nq = (Sq + tq - 1) // tq

    if heads_per_step is not None:
        G = heads_per_step
    else:
        G = min(BH, 16)
        if G >= 2:
            G -= G % 2                           # even G -> packed output
        # v7x megacore: keep at least one "parallel" axis with extent >= 2
        # when it costs almost nothing (it only splits the (b,h) batching).
        if (BH + G - 1) // G == 1 and nq == 1 and G >= 4:
            G //= 2

    # ---- VMEM budget (128 MiB/TC on v5e/v6e, 64 MiB/TC on v7x) ----
    try:
        vmem_cap = pltpu.get_tpu_info().vmem_capacity_bytes
    except Exception:
        vmem_cap = 64 << 20
    budget = int(0.8 * vmem_cap)
    esize = jnp.dtype(compute_dtype).itemsize

    def vmem_estimate(g, tkk):
        blocks = (g * tq * D * esize             # Q
                  + g * tkk * D * esize          # K
                  + g * tkk * Dv * esize         # V
                  + g * tq * 4 + g * tkk * 4     # pad flag vectors
                  + g * tq * max(Dv, 128) * 4)   # output (f32)
        scratch = g * tq * (Dv + 2) * 4          # acc + m + l
        work = 4 * g * tq * tkk * 4              # score/prob temporaries
        return 2 * blocks + scratch + work       # blocks are double-buffered

    while vmem_estimate(G, tk) > budget and (tk > 128 or G > 1):
        if tk > 128:
            tk = max(128, tk // 2)
        else:
            G = max(1, G // 2)

    Sq_p = _round_up(Sq, tq)
    Sk_p = _round_up(Sk, tk)
    BH_p = _round_up(BH, G)

    # ---- padding (padded keys are masked via the k-pad flags) ----
    if Sq_p != Sq:
        q = jnp.pad(q, ((0, 0), (0, Sq_p - Sq), (0, 0)))
        qp = jnp.pad(qp, ((0, 0), (0, Sq_p - Sq)), constant_values=1.0)
    if Sk_p != Sk:
        k = jnp.pad(k, ((0, 0), (0, Sk_p - Sk), (0, 0)))
        v = jnp.pad(v, ((0, 0), (0, Sk_p - Sk), (0, 0)))
        kp = jnp.pad(kp, ((0, 0), (0, Sk_p - Sk)), constant_values=1.0)
    if BH_p != BH:
        pad = BH_p - BH
        q = jnp.pad(q, ((0, pad), (0, 0), (0, 0)))
        k = jnp.pad(k, ((0, pad), (0, 0), (0, 0)))
        v = jnp.pad(v, ((0, pad), (0, 0), (0, 0)))
        qp = jnp.pad(qp, ((0, pad), (0, 0)), constant_values=1.0)
        kp = jnp.pad(kp, ((0, pad), (0, 0)), constant_values=1.0)

    qp = qp[:, :, None]            # (BH_p, Sq_p, 1)
    kp = kp[:, None, :]            # (BH_p, 1, Sk_p)

    # ---- lane-dense packed output (2*Dv == 128 lanes) ----
    pack_out = (G % 2 == 0) and (G >= 2) and (Dv % 128 != 0) \
        and ((2 * Dv) % 128 == 0)
    if pack_out:
        out_rows, out_feat = BH_p // 2, 2 * Dv
        out_block = (G // 2, tq, 2 * Dv)
    else:
        out_rows, out_feat = BH_p, Dv
        out_block = (G, tq, Dv)

    grid = (BH_p // G, Sq_p // tq, Sk_p // tk)

    needed = vmem_estimate(G, tk)
    vmem_limit = int(min(budget, max(needed + (4 << 20), 24 << 20)))

    kernel = functools.partial(_flash_sdpa_kernel, scale=scale, causal=causal,
                               tq=tq, tk=tk, pack_out=pack_out)

    out = pl.pallas_call(
        kernel,
        out_shape=jax.ShapeDtypeStruct((out_rows, Sq_p, out_feat), jnp.float32),
        grid_spec=pltpu.PrefetchScalarGridSpec(
            num_scalar_prefetch=0,
            grid=grid,
            in_specs=[
                pl.BlockSpec((G, tq, 1), lambda g, qi, ki: (g, qi, 0)),   # q pad
                pl.BlockSpec((G, 1, tk), lambda g, qi, ki: (g, 0, ki)),   # k pad
                pl.BlockSpec((G, tq, D), lambda g, qi, ki: (g, qi, 0)),   # Q
                pl.BlockSpec((G, tk, D), lambda g, qi, ki: (g, ki, 0)),   # K
                pl.BlockSpec((G, tk, Dv), lambda g, qi, ki: (g, ki, 0)),  # V
            ],
            out_specs=pl.BlockSpec(out_block, lambda g, qi, ki: (g, qi, 0)),
            scratch_shapes=[
                pltpu.VMEM((G, tq, 1), jnp.float32),   # running max
                pltpu.VMEM((G, tq, 1), jnp.float32),   # running denom
                pltpu.VMEM((G, tq, Dv), jnp.float32),  # f32 accumulator
            ],
        ),
        compiler_params=pltpu.CompilerParams(
            dimension_semantics=("parallel", "parallel", "arbitrary"),
            vmem_limit_bytes=vmem_limit,
        ),
    )(qp, kp, q, k, v)

    if pack_out:
        nb = BH_p // G
        out = out.reshape(nb, G // 2, Sq_p, 2, Dv)
        out = jnp.moveaxis(out, 3, 1)              # (nb, 2, G//2, Sq_p, Dv)
        out = out.reshape(BH_p, Sq_p, Dv)
    out = out[:BH, :Sq]
    return out.reshape(B, H, Sq, Dv).astype(out_dtype)


def build_dense_mask(mask_info):
    """Dense (B, 1, Sq, Sk) boolean mask for the pure-JAX reference path."""
    q_pad, k_pad = mask_info["q_pad"], mask_info["k_pad"]
    Sq, Sk = q_pad.shape[1], k_pad.shape[1]
    mask = jnp.logical_or(q_pad[:, :, None], k_pad[:, None, :])
    if mask_info["causal"]:
        tri = jnp.triu(jnp.ones((Sq, Sk), dtype=jnp.bool_), k=1)
        mask = jnp.logical_or(mask, tri[None])
    return mask[:, None]


def sdpa_reference(Q, K, V, mask, *, scale, compute_dtype=jnp.bfloat16):
    Qc, Kc, Vc = (x.astype(compute_dtype) for x in (Q, K, V))
    score = jnp.einsum("bhqd,bhkd->bhqk", Qc, Kc,
                       preferred_element_type=jnp.float32) * scale
    score = jnp.where(mask, jnp.float32(NEG_FILL), score)
    attn = jax.nn.softmax(score, axis=-1)
    attn = jnp.where(mask, 0.0, attn)
    ctx = jnp.einsum("bhqk,bhkd->bhqd", attn.astype(compute_dtype), Vc,
                     preferred_element_type=jnp.float32)
    return ctx.astype(Q.dtype)


# =====================================================================
# Decoder (plain-JAX glue around the Pallas attention core)
# =====================================================================
def init_linear(key, fan_in, fan_out, bias=False):
    bound = 1.0 / math.sqrt(fan_in)
    kw, kb = jax.random.split(key)
    p = {"W": jax.random.uniform(kw, (fan_in, fan_out), jnp.float32, -bound, bound)}
    if bias:
        p["b"] = jax.random.uniform(kb, (fan_out,), jnp.float32, -bound, bound)
    return p


def linear(p, x):
    y = x @ p["W"]
    if "b" in p:
        y = y + p["b"]
    return y


def layer_norm(x, eps=1e-5):
    mu = jnp.mean(x, axis=-1, keepdims=True)
    var = jnp.mean(jnp.square(x - mu), axis=-1, keepdims=True)
    return (x - mu) * jax.lax.rsqrt(var + eps)


def positional_encoding_table(max_len, dm):
    pe = np.zeros((max_len, dm), dtype=np.float32)
    pos = np.arange(0, max_len, dtype=np.float32)[:, None]
    div = np.exp(np.arange(0, dm, 2, dtype=np.float32) * (-math.log(10000.0) / dm))
    pe[:, 0::2] = np.sin(pos * div)
    pe[:, 1::2] = np.cos(pos * div)
    return jnp.asarray(pe)


def multi_head_attention(params, input_Q, input_K, input_V, mask_info,
                         use_pallas, compute_dtype):
    B = input_Q.shape[0]
    residual = input_Q
    Q = linear(params["W_Q"], input_Q).reshape(B, -1, n_head, d_Q).transpose(0, 2, 1, 3)
    K = linear(params["W_K"], input_K).reshape(B, -1, n_head, d_Q).transpose(0, 2, 1, 3)
    V = linear(params["W_V"], input_V).reshape(B, -1, n_head, d_V).transpose(0, 2, 1, 3)
    # Module quirk: scale uses the global constant d_Q (head dim == d_Q here).
    scale = 1.0 / math.sqrt(d_Q)
    if use_pallas:
        context = scaled_dot_product_attention(
            Q, K, V, q_pad=mask_info["q_pad"], k_pad=mask_info["k_pad"],
            causal=mask_info["causal"], scale=scale,
            compute_dtype=compute_dtype)
    else:
        context = sdpa_reference(Q, K, V, build_dense_mask(mask_info),
                                 scale=scale, compute_dtype=compute_dtype)
    context = context.transpose(0, 2, 1, 3).reshape(B, -1, n_head * d_V)
    out = linear(params["fc"], context)
    return layer_norm(out + residual)


def ffn(params, x):
    residual = x
    h = jax.nn.relu(linear(params["fc1"], x))
    out = linear(params["fc2"], h)
    return layer_norm(out + residual)


def decoder_layer(params, dec_emb, enc_emb, self_mask, cross_mask,
                  use_pallas, compute_dtype):
    dec_emb = multi_head_attention(params["self_attn"], dec_emb, dec_emb, dec_emb,
                                   self_mask, use_pallas, compute_dtype)
    dec_emb = multi_head_attention(params["cross_attn"], dec_emb, enc_emb, enc_emb,
                                   cross_mask, use_pallas, compute_dtype)
    return ffn(params["ffn"], dec_emb)


def decoder_forward(params, position_seq, position_graph, enc_embedding,
                    use_pallas=True, compute_dtype=jnp.bfloat16):
    B, S, _ = position_seq.shape
    dec_emb = linear(params["pos2emb"], position_seq)          # position2embedding
    dec_emb = dec_emb + params["pe"][:S][None, :, :]           # PositionEncoding
    # TODO(synk): PositionEncoding dropout (p=0.1) is omitted (eval/inference mode).
    # Pad / causal info is computed ONCE per forward and reused by all layers
    # (no per-layer O(Sq*Sk) mask materialization).
    seq_pad = position_seq[:, :, 1] == -1.0                    # (B, S)
    graph_pad = position_graph[:, :, 1] == -1.0                # (B, Sg)
    self_mask = {"q_pad": seq_pad, "k_pad": seq_pad, "causal": True}
    cross_mask = {"q_pad": seq_pad, "k_pad": graph_pad, "causal": False}
    for lp in params["layers"]:
        dec_emb = decoder_layer(lp, dec_emb, enc_embedding, self_mask,
                                cross_mask, use_pallas, compute_dtype)
    return dec_emb


def init_params(key, max_len=512):
    keys = jax.random.split(key, 1 + n_layers)

    def mha_params(k):
        k1, k2, k3, k4 = jax.random.split(k, 4)
        return {"W_Q": init_linear(k1, d_model, d_Q * n_head),
                "W_K": init_linear(k2, d_model, d_Q * n_head),
                "W_V": init_linear(k3, d_model, d_V * n_head),
                "fc": init_linear(k4, d_V * n_head, d_model)}

    params = {"pos2emb": init_linear(keys[0], d_feature, d_model, bias=True),
              "pe": positional_encoding_table(max_len, d_model),
              "layers": []}
    for i in range(n_layers):
        k_sa, k_ca, kf1, kf2 = jax.random.split(keys[1 + i], 4)
        params["layers"].append({
            "self_attn": mha_params(k_sa),
            "cross_attn": mha_params(k_ca),
            "ffn": {"fc1": init_linear(kf1, d_model, d_ff),
                    "fc2": init_linear(kf2, d_ff, d_model)},
        })
    return params


if __name__ == "__main__":
    key = jax.random.PRNGKey(0)
    kparams, ks, kg, ke = jax.random.split(key, 4)

    B, seq_len, graph_len = 2, 8, 16
    params = init_params(kparams)

    position_seq = jax.random.normal(ks, (B, seq_len, d_feature), jnp.float32)
    position_graph = jax.random.normal(kg, (B, graph_len, d_feature), jnp.float32)
    # mark some nodes as padding (feature 1 == -1 -> masked by the pad mask)
    position_seq = position_seq.at[0, -1, 1].set(-1.0)
    position_graph = position_graph.at[1, -3:, 1].set(-1.0)
    enc_embedding = jax.random.normal(ke, (B, graph_len, d_model), jnp.float32)

    fwd = jax.jit(functools.partial(decoder_forward, use_pallas=True))
    out = jax.block_until_ready(fwd(params, position_seq, position_graph,
                                    enc_embedding))

    ref_fn = jax.jit(functools.partial(decoder_forward, use_pallas=False))
    ref = jax.block_until_ready(ref_fn(params, position_seq, position_graph,
                                       enc_embedding))

    assert out.shape == (B, seq_len, d_model)
    assert bool(jnp.all(jnp.isfinite(out)))
    err = float(jnp.max(jnp.abs(out - ref)))
    assert jnp.allclose(out, ref, atol=5e-3, rtol=5e-3), (
        f"mismatch vs reference: max abs err = {err}")

    print("KERNEL_OK")
</pallas_src>

<mosaic_0001>
module attributes {stable_mosaic.version = 11 : i64} {
  func.func @_flash_sdpa_kernel(%arg0: i32, %arg1: i32, %arg2: i32, %arg3: memref<2x8x1xf32, #tpu.memory_space<vmem>>, %arg4: memref<2x1x128xf32, #tpu.memory_space<vmem>>, %arg5: memref<2x8x64xbf16, #tpu.memory_space<vmem>>, %arg6: memref<2x128x64xbf16, #tpu.memory_space<vmem>>, %arg7: memref<2x128x64xbf16, #tpu.memory_space<vmem>>, %arg8: memref<1x8x128xf32, #tpu.memory_space<vmem>>, %arg9: memref<2x8x1xf32, #tpu.memory_space<vmem>>, %arg10: memref<2x8x1xf32, #tpu.memory_space<vmem>>, %arg11: memref<2x8x64xf32, #tpu.memory_space<vmem>>) attributes {dimension_semantics = [#tpu.dimension_semantics<parallel>, #tpu.dimension_semantics<parallel>, #tpu.dimension_semantics<arbitrary>], iteration_bounds = array<i64: 1, 1, 1>, scalar_prefetch = 0 : i64, scratch_operands = 3 : i64, tpu.core_type = #tpu.core_type<tc>, window_params = [{transform_indices = @transform_0, window_bounds = array<i64: 2, 8, 1>}, {transform_indices = @transform_1, window_bounds = array<i64: 2, 1, 128>}, {transform_indices = @transform_2, window_bounds = array<i64: 2, 8, 64>}, {transform_indices = @transform_3, window_bounds = array<i64: 2, 128, 64>}, {transform_indices = @transform_4, window_bounds = array<i64: 2, 128, 64>}, {transform_indices = @transform_5, window_bounds = array<i64: 1, 8, 128>}]} {
    %c0_i32 = arith.constant 0 : i32
    %0 = arith.cmpi eq, %arg2, %c0_i32 : i32
    %1 = arith.extui %0 : i1 to i32
    %c0_i32_0 = arith.constant 0 : i32
    %2 = arith.cmpi ne, %1, %c0_i32_0 : i32
    scf.if %2 {
      %cst = arith.constant 0xFF800000 : f32
      %13 = vector.broadcast %cst : f32 to vector<2x8x1xf32>
      %c0 = arith.constant 0 : index
      %c0_5 = arith.constant 0 : index
      %c0_6 = arith.constant 0 : index
      %14 = vector.load %arg9[%c0, %c0_5, %c0_6] : memref<2x8x1xf32, #tpu.memory_space<vmem>>, vector<2x8x1xf32>
      tpu.vector_store %arg9[%c0, %c0_5, %c0_6], %13 {strides = array<i32>} : memref<2x8x1xf32, #tpu.memory_space<vmem>>, vector<2x8x1xf32>,
      %cst_7 = arith.constant 0.000000e+00 : f32
      %15 = vector.broadcast %cst_7 : f32 to vector<2x8x1xf32>
      %c0_8 = arith.constant 0 : index
      %c0_9 = arith.constant 0 : index
      %c0_10 = arith.constant 0 : index
      %16 = vector.load %arg10[%c0_8, %c0_9, %c0_10] : memref<2x8x1xf32, #tpu.memory_space<vmem>>, vector<2x8x1xf32>
      tpu.vector_store %arg10[%c0_8, %c0_9, %c0_10], %15 {strides = array<i32>} : memref<2x8x1xf32, #tpu.memory_space<vmem>>, vector<2x8x1xf32>,
      %cst_11 = arith.constant 0.000000e+00 : f32
      %17 = vector.broadcast %cst_11 : f32 to vector<2x8x64xf32>
      %c0_12 = arith.constant 0 : index
      %c0_13 = arith.constant 0 : index
      %c0_14 = arith.constant 0 : index
      %18 = vector.load %arg11[%c0_12, %c0_13, %c0_14] : memref<2x8x64xf32, #tpu.memory_space<vmem>>, vector<2x8x64xf32>
      tpu.vector_store %arg11[%c0_12, %c0_13, %c0_14], %17 {strides = array<i32>} : memref<2x8x64xf32, #tpu.memory_space<vmem>>, vector<2x8x64xf32>,
    } else {
    }
    %c128_i32 = arith.constant 128 : i32
    %3 = arith.muli %arg2, %c128_i32 : i32
    %c8_i32 = arith.constant 8 : i32
    %4 = arith.muli %arg1, %c8_i32 : i32
    %c8_i32_1 = arith.constant 8 : i32
    %5 = arith.addi %4, %c8_i32_1 : i32
    %c1_i32 = arith.constant 1 : i32
    %6 = arith.subi %5, %c1_i32 : i32
    %7 = arith.cmpi sle, %3, %6 : i32
    %8 = arith.extui %7 : i1 to i32
    %c0_i32_2 = arith.constant 0 : i32
    %9 = arith.cmpi ne, %8, %c0_i32_2 : i32
    scf.if %9 {
      %c0 = arith.constant 0 : index
      %c0_5 = arith.constant 0 : index
      %c0_6 = arith.constant 0 : index
      %13 = vector.load %arg5[%c0, %c0_5, %c0_6] : memref<2x8x64xbf16, #tpu.memory_space<vmem>>, vector<2x8x64xbf16>
      %cst = arith.constant 1.250000e-01 : bf16
      %14 = vector.broadcast %cst : bf16 to vector<2x8x64xbf16>
      %15 = arith.mulf %13, %14 : vector<2x8x64xbf16>
      %c0_7 = arith.constant 0 : index
      %c0_8 = arith.constant 0 : index
      %c0_9 = arith.constant 0 : index
      %16 = vector.load %arg6[%c0_7, %c0_8, %c0_9] : memref<2x128x64xbf16, #tpu.memory_space<vmem>>, vector<2x128x64xbf16>
      "tpu.trace_start"() <{level = 10 : i32, message = "gqd,gkd->gqk"}> : () -> ()
      %cst_10 = arith.constant dense<0.000000e+00> : vector<2x8x128xf32>
      %17 = tpu.matmul %15, %16, %cst_10 {dimension_numbers = #tpu.dot_dimension_numbers<[2], [2], [1], [1], [0, 0, 0, 1, 1, 1], [0], [0]>} : vector<2x8x64xbf16>, vector<2x128x64xbf16>, vector<2x8x128xf32> -> vector<2x8x128xf32>
      "tpu.trace_stop"() : () -> ()
      %c0_11 = arith.constant 0 : index
      %c0_12 = arith.constant 0 : index
      %c0_13 = arith.constant 0 : index
      %18 = vector.load %arg3[%c0_11, %c0_12, %c0_13] : memref<2x8x1xf32, #tpu.memory_space<vmem>>, vector<2x8x1xf32>
      %cst_14 = arith.constant 0.000000e+00 : f32
      %19 = vector.broadcast %cst_14 : f32 to vector<2x8x1xf32>
      %20 = arith.cmpf one, %18, %19 : vector<2x8x1xf32>
      %c0_15 = arith.constant 0 : index
      %c0_16 = arith.constant 0 : index
      %c0_17 = arith.constant 0 : index
      %21 = vector.load %arg4[%c0_15, %c0_16, %c0_17] : memref<2x1x128xf32, #tpu.memory_space<vmem>>, vector<2x1x128xf32>
      %cst_18 = arith.constant 0.000000e+00 : f32
      %22 = vector.broadcast %cst_18 : f32 to vector<2x1x128xf32>
      %23 = arith.cmpf one, %21, %22 : vector<2x1x128xf32>
      %24 = vector.broadcast %20 : vector<2x8x1xi1> to vector<2x8x128xi1>
      %25 = vector.broadcast %23 : vector<2x1x128xi1> to vector<2x8x128xi1>
      %26 = arith.ori %24, %25 : vector<2x8x128xi1>
      %c8_i32_19 = arith.constant 8 : i32
      %27 = arith.muli %arg1, %c8_i32_19 : i32
      %28 = tpu.iota {dimensions = array<i32: 0>} : vector<8x128xi32>
      %29 = vector.broadcast %27 : i32 to vector<8x128xi32>
      %30 = arith.addi %29, %28 : vector<8x128xi32>
      %c128_i32_20 = arith.constant 128 : i32
      %31 = arith.muli %arg2, %c128_i32_20 : i32
      %32 = tpu.iota {dimensions = array<i32: 1>} : vector<8x128xi32>
      %33 = vector.broadcast %31 : i32 to vector<8x128xi32>
      %34 = arith.addi %33, %32 : vector<8x128xi32>
      %35 = arith.cmpi sgt, %34, %30 : vector<8x128xi32>
      %36 = vector.shape_cast %35 : vector<8x128xi1> to vector<1x8x128xi1>
      %37 = vector.broadcast %36 : vector<1x8x128xi1> to vector<2x8x128xi1>
      %38 = arith.ori %26, %37 : vector<2x8x128xi1>
      %cst_21 = arith.constant -1.000000e+09 : f32
      %39 = vector.broadcast %cst_21 : f32 to vector<2x8x128xf32>
      %40 = arith.select %38, %39, %17 : vector<2x8x128xi1>, vector<2x8x128xf32>
      %c0_22 = arith.constant 0 : index
      %c0_23 = arith.constant 0 : index
      %c0_24 = arith.constant 0 : index
      %41 = vector.load %arg9[%c0_22, %c0_23, %c0_24] : memref<2x8x1xf32, #tpu.memory_space<vmem>>, vector<2x8x1xf32>
      %cst_25 = arith.constant dense<0xFF800000> : vector<2x8xf32>
      %42 = vector.multi_reduction <maximumf>, %40, %cst_25 [2] : vector<2x8x128xf32> to vector<2x8xf32>
      %43 = vector.shape_cast %42 : vector<2x8xf32> to vector<2x8x1xf32>
      %44 = arith.maximumf %41, %43 : vector<2x8x1xf32>
      %45 = arith.subf %41, %44 : vector<2x8x1xf32>
      %46 = math.exp %45 : vector<2x8x1xf32>
      %47 = vector.broadcast %44 : vector<2x8x1xf32> to vector<2x8x128xf32>
      %48 = arith.subf %40, %47 : vector<2x8x128xf32>
      %49 = math.exp %48 : vector<2x8x128xf32>
      %c0_26 = arith.constant 0 : index
      %c0_27 = arith.constant 0 : index
      %c0_28 = arith.constant 0 : index
      %50 = vector.load %arg10[%c0_26, %c0_27, %c0_28] : memref<2x8x1xf32, #tpu.memory_space<vmem>>, vector<2x8x1xf32>
      %51 = arith.mulf %46, %50 : vector<2x8x1xf32>
      %cst_29 = arith.constant dense<0.000000e+00> : vector<2x8xf32>
      %52 = vector.multi_reduction <add>, %49, %cst_29 [2] : vector<2x8x128xf32> to vector<2x8xf32>
      %53 = vector.shape_cast %52 : vector<2x8xf32> to vector<2x8x1xf32>
      %54 = arith.addf %51, %53 : vector<2x8x1xf32>
      %c0_30 = arith.constant 0 : index
      %c0_31 = arith.constant 0 : index
      %c0_32 = arith.constant 0 : index
      %55 = vector.load %arg10[%c0_30, %c0_31, %c0_32] : memref<2x8x1xf32, #tpu.memory_space<vmem>>, vector<2x8x1xf32>
      tpu.vector_store %arg10[%c0_30, %c0_31, %c0_32], %54 {strides = array<i32>} : memref<2x8x1xf32, #tpu.memory_space<vmem>>, vector<2x8x1xf32>,
      %cst_33 = arith.constant 0.000000e+00 : f32
      %56 = vector.broadcast %cst_33 : f32 to vector<2x8x128xf32>
      %57 = arith.select %38, %56, %49 : vector<2x8x128xi1>, vector<2x8x128xf32>
      %c0_34 = arith.constant 0 : index
      %c0_35 = arith.constant 0 : index
      %c0_36 = arith.constant 0 : index
      %58 = vector.load %arg11[%c0_34, %c0_35, %c0_36] : memref<2x8x64xf32, #tpu.memory_space<vmem>>, vector<2x8x64xf32>
      %59 = vector.broadcast %46 : vector<2x8x1xf32> to vector<2x8x64xf32>
      %60 = arith.mulf %59, %58 : vector<2x8x64xf32>
      %61 = arith.truncf %57 : vector<2x8x128xf32> to vector<2x8x128xbf16>
      %c0_37 = arith.constant 0 : index
      %c0_38 = arith.constant 0 : index
      %c0_39 = arith.constant 0 : index
      %62 = vector.load %arg7[%c0_37, %c0_38, %c0_39] : memref<2x128x64xbf16, #tpu.memory_space<vmem>>, vector<2x128x64xbf16>
      "tpu.trace_start"() <{level = 10 : i32, message = "gqk,gkd->gqd"}> : () -> ()
      %cst_40 = arith.constant dense<0.000000e+00> : vector<2x8x64xf32>
      %63 = tpu.matmul %61, %62, %cst_40 {dimension_numbers = #tpu.dot_dimension_numbers<[2], [1], [1], [2], [0, 0, 0, 1, 1, 2], [0], [0]>} : vector<2x8x128xbf16>, vector<2x128x64xbf16>, vector<2x8x64xf32> -> vector<2x8x64xf32>
      "tpu.trace_stop"() : () -> ()
      %64 = arith.addf %60, %63 : vector<2x8x64xf32>
      %c0_41 = arith.constant 0 : index
      %c0_42 = arith.constant 0 : index
      %c0_43 = arith.constant 0 : index
      %65 = vector.load %arg11[%c0_41, %c0_42, %c0_43] : memref<2x8x64xf32, #tpu.memory_space<vmem>>, vector<2x8x64xf32>
      tpu.vector_store %arg11[%c0_41, %c0_42, %c0_43], %64 {strides = array<i32>} : memref<2x8x64xf32, #tpu.memory_space<vmem>>, vector<2x8x64xf32>,
      %c0_44 = arith.constant 0 : index
      %c0_45 = arith.constant 0 : index
      %c0_46 = arith.constant 0 : index
      %66 = vector.load %arg9[%c0_44, %c0_45, %c0_46] : memref<2x8x1xf32, #tpu.memory_space<vmem>>, vector<2x8x1xf32>
      tpu.vector_store %arg9[%c0_44, %c0_45, %c0_46], %44 {strides = array<i32>} : memref<2x8x1xf32, #tpu.memory_space<vmem>>, vector<2x8x1xf32>,
    } else {
    }
    %c0_i32_3 = arith.constant 0 : i32
    %10 = arith.cmpi eq, %arg2, %c0_i32_3 : i32
    %11 = arith.extui %10 : i1 to i32
    %c0_i32_4 = arith.constant 0 : i32
    %12 = arith.cmpi ne, %11, %c0_i32_4 : i32
    scf.if %12 {
      %c0 = arith.constant 0 : index
      %c0_5 = arith.constant 0 : index
      %c0_6 = arith.constant 0 : index
      %13 = vector.load %arg10[%c0, %c0_5, %c0_6] : memref<2x8x1xf32, #tpu.memory_space<vmem>>, vector<2x8x1xf32>
      %14 = tpu.reciprocal %13 : vector<2x8x1xf32> -> vector<2x8x1xf32>
      %c0_7 = arith.constant 0 : index
      %c0_8 = arith.constant 0 : index
      %c0_9 = arith.constant 0 : index
      %15 = vector.load %arg11[%c0_7, %c0_8, %c0_9] : memref<2x8x64xf32, #tpu.memory_space<vmem>>, vector<2x8x64xf32>
      %16 = vector.broadcast %14 : vector<2x8x1xf32> to vector<2x8x64xf32>
      %17 = arith.mulf %15, %16 : vector<2x8x64xf32>
      %18 = vector.extract_strided_slice %17 {offsets = [0, 0, 0], sizes = [1, 8, 64], strides = [1, 1, 1]} : vector<2x8x64xf32> to vector<1x8x64xf32>
      %19 = vector.extract_strided_slice %17 {offsets = [1, 0, 0], sizes = [1, 8, 64], strides = [1, 1, 1]} : vector<2x8x64xf32> to vector<1x8x64xf32>
      %20 = tpu.concatenate %18, %19 in 2 : vector<1x8x64xf32>, vector<1x8x64xf32> -> vector<1x8x128xf32>
      %c0_10 = arith.constant 0 : index
      %c0_11 = arith.constant 0 : index
      %c0_12 = arith.constant 0 : index
      %21 = vector.load %arg8[%c0_10, %c0_11, %c0_12] : memref<1x8x128xf32, #tpu.memory_space<vmem>>, vector<1x8x128xf32>
      tpu.vector_store %arg8[%c0_10, %c0_11, %c0_12], %20 {strides = array<i32>} : memref<1x8x128xf32, #tpu.memory_space<vmem>>, vector<1x8x128xf32>,
    } else {
    }
    return
  }
  func.func @transform_0(%arg0: i32, %arg1: i32, %arg2: i32) -> (i32, i32, i32) {
    %c0_i32 = arith.constant 0 : i32
    %c0_i32_0 = arith.constant 0 : i32
    return %arg0, %arg1, %c0_i32 : i32, i32, i32
  }
  func.func @transform_1(%arg0: i32, %arg1: i32, %arg2: i32) -> (i32, i32, i32) {
    %c0_i32 = arith.constant 0 : i32
    %c0_i32_0 = arith.constant 0 : i32
    return %arg0, %c0_i32, %arg2 : i32, i32, i32
  }
  func.func @transform_2(%arg0: i32, %arg1: i32, %arg2: i32) -> (i32, i32, i32) {
    %c0_i32 = arith.constant 0 : i32
    %c0_i32_0 = arith.constant 0 : i32
    return %arg0, %arg1, %c0_i32 : i32, i32, i32
  }
  func.func @transform_3(%arg0: i32, %arg1: i32, %arg2: i32) -> (i32, i32, i32) {
    %c0_i32 = arith.constant 0 : i32
    %c0_i32_0 = arith.constant 0 : i32
    return %arg0, %arg2, %c0_i32 : i32, i32, i32
  }
  func.func @transform_4(%arg0: i32, %arg1: i32, %arg2: i32) -> (i32, i32, i32) {
    %c0_i32 = arith.constant 0 : i32
    %c0_i32_0 = arith.constant 0 : i32
    return %arg0, %arg2, %c0_i32 : i32, i32, i32
  }
  func.func @transform_5(%arg0: i32, %arg1: i32, %arg2: i32) -> (i32, i32, i32) {
    %c0_i32 = arith.constant 0 : i32
    %c0_i32_0 = arith.constant 0 : i32
    return %arg0, %arg1, %c0_i32 : i32, i32, i32
  }
}

module attributes {stable_mosaic.version = 11 : i64} {
  func.func @_flash_sdpa_kernel(%arg0: i32, %arg1: i32, %arg2: i32, %arg3: memref<2x8x1xf32, #tpu.memory_space<vmem>>, %arg4: memref<2x1x128xf32, #tpu.memory_space<vmem>>, %arg5: memref<2x8x64xbf16, #tpu.memory_space<vmem>>, %arg6: memref<2x128x64xbf16, #tpu.memory_space<vmem>>, %arg7: memref<2x128x64xbf16, #tpu.memory_space<vmem>>, %arg8: memref<1x8x128xf32, #tpu.memory_space<vmem>>, %arg9: memref<2x8x1xf32, #tpu.memory_space<vmem>>, %arg10: memref<2x8x1xf32, #tpu.memory_space<vmem>>, %arg11: memref<2x8x64xf32, #tpu.memory_space<vmem>>) attributes {dimension_semantics = [#tpu.dimension_semantics<parallel>, #tpu.dimension_semantics<parallel>, #tpu.dimension_semantics<arbitrary>], iteration_bounds = array<i64: 1, 1, 1>, scalar_prefetch = 0 : i64, scratch_operands = 3 : i64, tpu.core_type = #tpu.core_type<tc>, window_params = [{transform_indices = @transform_0, window_bounds = array<i64: 2, 8, 1>}, {transform_indices = @transform_1, window_bounds = array<i64: 2, 1, 128>}, {transform_indices = @transform_2, window_bounds = array<i64: 2, 8, 64>}, {transform_indices = @transform_3, window_bounds = array<i64: 2, 128, 64>}, {transform_indices = @transform_4, window_bounds = array<i64: 2, 128, 64>}, {transform_indices = @transform_5, window_bounds = array<i64: 1, 8, 128>}]} {
    %c0_i32 = arith.constant 0 : i32
    %0 = arith.cmpi eq, %arg2, %c0_i32 : i32
    %1 = arith.extui %0 : i1 to i32
    %c0_i32_0 = arith.constant 0 : i32
    %2 = arith.cmpi ne, %1, %c0_i32_0 : i32
    scf.if %2 {
      %cst_43 = arith.constant 0xFF800000 : f32
      %48 = vector.broadcast %cst_43 : f32 to vector<2x8x1xf32>
      %c0_44 = arith.constant 0 : index
      %c0_45 = arith.constant 0 : index
      %c0_46 = arith.constant 0 : index
      %49 = vector.load %arg9[%c0_44, %c0_45, %c0_46] : memref<2x8x1xf32, #tpu.memory_space<vmem>>, vector<2x8x1xf32>
      tpu.vector_store %arg9[%c0_44, %c0_45, %c0_46], %48 {strides = array<i32>} : memref<2x8x1xf32, #tpu.memory_space<vmem>>, vector<2x8x1xf32>,
      %cst_47 = arith.constant 0.000000e+00 : f32
      %50 = vector.broadcast %cst_47 : f32 to vector<2x8x1xf32>
      %c0_48 = arith.constant 0 : index
      %c0_49 = arith.constant 0 : index
      %c0_50 = arith.constant 0 : index
      %51 = vector.load %arg10[%c0_48, %c0_49, %c0_50] : memref<2x8x1xf32, #tpu.memory_space<vmem>>, vector<2x8x1xf32>
      tpu.vector_store %arg10[%c0_48, %c0_49, %c0_50], %50 {strides = array<i32>} : memref<2x8x1xf32, #tpu.memory_space<vmem>>, vector<2x8x1xf32>,
      %cst_51 = arith.constant 0.000000e+00 : f32
      %52 = vector.broadcast %cst_51 : f32 to vector<2x8x64xf32>
      %c0_52 = arith.constant 0 : index
      %c0_53 = arith.constant 0 : index
      %c0_54 = arith.constant 0 : index
      %53 = vector.load %arg11[%c0_52, %c0_53, %c0_54] : memref<2x8x64xf32, #tpu.memory_space<vmem>>, vector<2x8x64xf32>
      tpu.vector_store %arg11[%c0_52, %c0_53, %c0_54], %52 {strides = array<i32>} : memref<2x8x64xf32, #tpu.memory_space<vmem>>, vector<2x8x64xf32>,
    } else {
    }
    %c0 = arith.constant 0 : index
    %c0_1 = arith.constant 0 : index
    %c0_2 = arith.constant 0 : index
    %3 = vector.load %arg5[%c0, %c0_1, %c0_2] : memref<2x8x64xbf16, #tpu.memory_space<vmem>>, vector<2x8x64xbf16>
    %cst = arith.constant 1.250000e-01 : bf16
    %4 = vector.broadcast %cst : bf16 to vector<2x8x64xbf16>
    %5 = arith.mulf %3, %4 : vector<2x8x64xbf16>
    %c0_3 = arith.constant 0 : index
    %c0_4 = arith.constant 0 : index
    %c0_5 = arith.constant 0 : index
    %6 = vector.load %arg6[%c0_3, %c0_4, %c0_5] : memref<2x128x64xbf16, #tpu.memory_space<vmem>>, vector<2x128x64xbf16>
    "tpu.trace_start"() <{level = 10 : i32, message = "gqd,gkd->gqk"}> : () -> ()
    %cst_6 = arith.constant dense<0.000000e+00> : vector<2x8x128xf32>
    %7 = tpu.matmul %5, %6, %cst_6 {dimension_numbers = #tpu.dot_dimension_numbers<[2], [2], [1], [1], [0, 0, 0, 1, 1, 1], [0], [0]>} : vector<2x8x64xbf16>, vector<2x128x64xbf16>, vector<2x8x128xf32> -> vector<2x8x128xf32>
    "tpu.trace_stop"() : () -> ()
    %c0_7 = arith.constant 0 : index
    %c0_8 = arith.constant 0 : index
    %c0_9 = arith.constant 0 : index
    %8 = vector.load %arg3[%c0_7, %c0_8, %c0_9] : memref<2x8x1xf32, #tpu.memory_space<vmem>>, vector<2x8x1xf32>
    %cst_10 = arith.constant 0.000000e+00 : f32
    %9 = vector.broadcast %cst_10 : f32 to vector<2x8x1xf32>
    %10 = arith.cmpf one, %8, %9 : vector<2x8x1xf32>
    %c0_11 = arith.constant 0 : index
    %c0_12 = arith.constant 0 : index
    %c0_13 = arith.constant 0 : index
    %11 = vector.load %arg4[%c0_11, %c0_12, %c0_13] : memref<2x1x128xf32, #tpu.memory_space<vmem>>, vector<2x1x128xf32>
    %cst_14 = arith.constant 0.000000e+00 : f32
    %12 = vector.broadcast %cst_14 : f32 to vector<2x1x128xf32>
    %13 = arith.cmpf one, %11, %12 : vector<2x1x128xf32>
    %14 = vector.broadcast %10 : vector<2x8x1xi1> to vector<2x8x128xi1>
    %15 = vector.broadcast %13 : vector<2x1x128xi1> to vector<2x8x128xi1>
    %16 = arith.ori %14, %15 : vector<2x8x128xi1>
    %cst_15 = arith.constant -1.000000e+09 : f32
    %17 = vector.broadcast %cst_15 : f32 to vector<2x8x128xf32>
    %18 = arith.select %16, %17, %7 : vector<2x8x128xi1>, vector<2x8x128xf32>
    %c0_16 = arith.constant 0 : index
    %c0_17 = arith.constant 0 : index
    %c0_18 = arith.constant 0 : index
    %19 = vector.load %arg9[%c0_16, %c0_17, %c0_18] : memref<2x8x1xf32, #tpu.memory_space<vmem>>, vector<2x8x1xf32>
    %cst_19 = arith.constant dense<0xFF800000> : vector<2x8xf32>
    %20 = vector.multi_reduction <maximumf>, %18, %cst_19 [2] : vector<2x8x128xf32> to vector<2x8xf32>
    %21 = vector.shape_cast %20 : vector<2x8xf32> to vector<2x8x1xf32>
    %22 = arith.maximumf %19, %21 : vector<2x8x1xf32>
    %23 = arith.subf %19, %22 : vector<2x8x1xf32>
    %24 = math.exp %23 : vector<2x8x1xf32>
    %25 = vector.broadcast %22 : vector<2x8x1xf32> to vector<2x8x128xf32>
    %26 = arith.subf %18, %25 : vector<2x8x128xf32>
    %27 = math.exp %26 : vector<2x8x128xf32>
    %c0_20 = arith.constant 0 : index
    %c0_21 = arith.constant 0 : index
    %c0_22 = arith.constant 0 : index
    %28 = vector.load %arg10[%c0_20, %c0_21, %c0_22] : memref<2x8x1xf32, #tpu.memory_space<vmem>>, vector<2x8x1xf32>
    %29 = arith.mulf %24, %28 : vector<2x8x1xf32>
    %cst_23 = arith.constant dense<0.000000e+00> : vector<2x8xf32>
    %30 = vector.multi_reduction <add>, %27, %cst_23 [2] : vector<2x8x128xf32> to vector<2x8xf32>
    %31 = vector.shape_cast %30 : vector<2x8xf32> to vector<2x8x1xf32>
    %32 = arith.addf %29, %31 : vector<2x8x1xf32>
    %c0_24 = arith.constant 0 : index
    %c0_25 = arith.constant 0 : index
    %c0_26 = arith.constant 0 : index
    %33 = vector.load %arg10[%c0_24, %c0_25, %c0_26] : memref<2x8x1xf32, #tpu.memory_space<vmem>>, vector<2x8x1xf32>
    tpu.vector_store %arg10[%c0_24, %c0_25, %c0_26], %32 {strides = array<i32>} : memref<2x8x1xf32, #tpu.memory_space<vmem>>, vector<2x8x1xf32>,
    %cst_27 = arith.constant 0.000000e+00 : f32
    %34 = vector.broadcast %cst_27 : f32 to vector<2x8x128xf32>
    %35 = arith.select %16, %34, %27 : vector<2x8x128xi1>, vector<2x8x128xf32>
    %c0_28 = arith.constant 0 : index
    %c0_29 = arith.constant 0 : index
    %c0_30 = arith.constant 0 : index
    %36 = vector.load %arg11[%c0_28, %c0_29, %c0_30] : memref<2x8x64xf32, #tpu.memory_space<vmem>>, vector<2x8x64xf32>
    %37 = vector.broadcast %24 : vector<2x8x1xf32> to vector<2x8x64xf32>
    %38 = arith.mulf %37, %36 : vector<2x8x64xf32>
    %39 = arith.truncf %35 : vector<2x8x128xf32> to vector<2x8x128xbf16>
    %c0_31 = arith.constant 0 : index
    %c0_32 = arith.constant 0 : index
    %c0_33 = arith.constant 0 : index
    %40 = vector.load %arg7[%c0_31, %c0_32, %c0_33] : memref<2x128x64xbf16, #tpu.memory_space<vmem>>, vector<2x128x64xbf16>
    "tpu.trace_start"() <{level = 10 : i32, message = "gqk,gkd->gqd"}> : () -> ()
    %cst_34 = arith.constant dense<0.000000e+00> : vector<2x8x64xf32>
    %41 = tpu.matmul %39, %40, %cst_34 {dimension_numbers = #tpu.dot_dimension_numbers<[2], [1], [1], [2], [0, 0, 0, 1, 1, 2], [0], [0]>} : vector<2x8x128xbf16>, vector<2x128x64xbf16>, vector<2x8x64xf32> -> vector<2x8x64xf32>
    "tpu.trace_stop"() : () -> ()
    %42 = arith.addf %38, %41 : vector<2x8x64xf32>
    %c0_35 = arith.constant 0 : index
    %c0_36 = arith.constant 0 : index
    %c0_37 = arith.constant 0 : index
    %43 = vector.load %arg11[%c0_35, %c0_36, %c0_37] : memref<2x8x64xf32, #tpu.memory_space<vmem>>, vector<2x8x64xf32>
    tpu.vector_store %arg11[%c0_35, %c0_36, %c0_37], %42 {strides = array<i32>} : memref<2x8x64xf32, #tpu.memory_space<vmem>>, vector<2x8x64xf32>,
    %c0_38 = arith.constant 0 : index
    %c0_39 = arith.constant 0 : index
    %c0_40 = arith.constant 0 : index
    %44 = vector.load %arg9[%c0_38, %c0_39, %c0_40] : memref<2x8x1xf32, #tpu.memory_space<vmem>>, vector<2x8x1xf32>
    tpu.vector_store %arg9[%c0_38, %c0_39, %c0_40], %22 {strides = array<i32>} : memref<2x8x1xf32, #tpu.memory_space<vmem>>, vector<2x8x1xf32>,
    %c0_i32_41 = arith.constant 0 : i32
    %45 = arith.cmpi eq, %arg2, %c0_i32_41 : i32
    %46 = arith.extui %45 : i1 to i32
    %c0_i32_42 = arith.constant 0 : i32
    %47 = arith.cmpi ne, %46, %c0_i32_42 : i32
    scf.if %47 {
      %c0_43 = arith.constant 0 : index
      %c0_44 = arith.constant 0 : index
      %c0_45 = arith.constant 0 : index
      %48 = vector.load %arg10[%c0_43, %c0_44, %c0_45] : memref<2x8x1xf32, #tpu.memory_space<vmem>>, vector<2x8x1xf32>
      %49 = tpu.reciprocal %48 : vector<2x8x1xf32> -> vector<2x8x1xf32>
      %c0_46 = arith.constant 0 : index
      %c0_47 = arith.constant 0 : index
      %c0_48 = arith.constant 0 : index
      %50 = vector.load %arg11[%c0_46, %c0_47, %c0_48] : memref<2x8x64xf32, #tpu.memory_space<vmem>>, vector<2x8x64xf32>
      %51 = vector.broadcast %49 : vector<2x8x1xf32> to vector<2x8x64xf32>
      %52 = arith.mulf %50, %51 : vector<2x8x64xf32>
      %53 = vector.extract_strided_slice %52 {offsets = [0, 0, 0], sizes = [1, 8, 64], strides = [1, 1, 1]} : vector<2x8x64xf32> to vector<1x8x64xf32>
      %54 = vector.extract_strided_slice %52 {offsets = [1, 0, 0], sizes = [1, 8, 64], strides = [1, 1, 1]} : vector<2x8x64xf32> to vector<1x8x64xf32>
      %55 = tpu.concatenate %53, %54 in 2 : vector<1x8x64xf32>, vector<1x8x64xf32> -> vector<1x8x128xf32>
      %c0_49 = arith.constant 0 : index
      %c0_50 = arith.constant 0 : index
      %c0_51 = arith.constant 0 : index
      %56 = vector.load %arg8[%c0_49, %c0_50, %c0_51] : memref<1x8x128xf32, #tpu.memory_space<vmem>>, vector<1x8x128xf32>
      tpu.vector_store %arg8[%c0_49, %c0_50, %c0_51], %55 {strides = array<i32>} : memref<1x8x128xf32, #tpu.memory_space<vmem>>, vector<1x8x128xf32>,
    } else {
    }
    return
  }
  func.func @transform_0(%arg0: i32, %arg1: i32, %arg2: i32) -> (i32, i32, i32) {
    %c0_i32 = arith.constant 0 : i32
    %c0_i32_0 = arith.constant 0 : i32
    return %arg0, %arg1, %c0_i32 : i32, i32, i32
  }
  func.func @transform_1(%arg0: i32, %arg1: i32, %arg2: i32) -> (i32, i32, i32) {
    %c0_i32 = arith.constant 0 : i32
    %c0_i32_0 = arith.constant 0 : i32
    return %arg0, %c0_i32, %arg2 : i32, i32, i32
  }
  func.func @transform_2(%arg0: i32, %arg1: i32, %arg2: i32) -> (i32, i32, i32) {
    %c0_i32 = arith.constant 0 : i32
    %c0_i32_0 = arith.constant 0 : i32
    return %arg0, %arg1, %c0_i32 : i32, i32, i32
  }
  func.func @transform_3(%arg0: i32, %arg1: i32, %arg2: i32) -> (i32, i32, i32) {
    %c0_i32 = arith.constant 0 : i32
    %c0_i32_0 = arith.constant 0 : i32
    return %arg0, %arg2, %c0_i32 : i32, i32, i32
  }
  func.func @transform_4(%arg0: i32, %arg1: i32, %arg2: i32) -> (i32, i32, i32) {
    %c0_i32 = arith.constant 0 : i32
    %c0_i32_0 = arith.constant 0 : i32
    return %arg0, %arg2, %c0_i32 : i32, i32, i32
  }
  func.func @transform_5(%arg0: i32, %arg1: i32, %arg2: i32) -> (i32, i32, i32) {
    %c0_i32 = arith.constant 0 : i32
    %c0_i32_0 = arith.constant 0 : i32
    return %arg0, %arg1, %c0_i32 : i32, i32, i32
  }
}

</mosaic_0001>

<llo_original>
// kernel: decoder_forward.12
$region0: #{decoder_forward.12}
  #allocation0 [shape = 'u32[]', space=smem, size = 0x4, offset = 0x4, fixed_abs, tag = 'smem constant byte address 0x4 - core index']
  #allocation1 [shape = 'u32[144,128]{1,0:T(1,128)}', space=vmem, size = 0x12000, scoped, tag = 'internal scratch']
  #allocation2 [shape = 'f32[2,8,1]{2,1,0:T(8,128)}', space=vmem, size = 0x2000, scoped, tag = 'scratch operand']
  #allocation3 [shape = 'f32[2,8,1]{2,1,0:T(8,128)}', space=vmem, size = 0x2000, scoped, tag = 'scratch operand']
  #allocation4 [shape = 'f32[2,8,64]{2,1,0:T(8,128)}', space=vmem, size = 0x2000, scoped, tag = 'scratch operand']
  %s0 = inlined_call_operand.vmem [shape: f32[2,8,1], index: 0, kind: input, shape index: {}]
  %s1 = inlined_call_operand.vmem [shape: f32[2,1,128], index: 1, kind: input, shape index: {}]
  %s2 = inlined_call_operand.vmem [shape: bf16[2,8,64], index: 2, kind: input, shape index: {}]
  %s3 = inlined_call_operand.vmem [shape: bf16[2,128,64], index: 3, kind: input, shape index: {}]
  %s4 = inlined_call_operand.vmem [shape: bf16[2,128,64], index: 4, kind: input, shape index: {}]
  %s5 = inlined_call_operand.vmem [shape: f32[1,8,128], index: 5, kind: output, shape index: {}]
  %s6 = sld [smem:[#allocation0]]
  $region42: #{decoder_forward.12} parent=0
    _
  %s8 = ssub.s32 1, %s6
  %s9 = scalar_select 0, %s8, %s6
  // Predicated region
  $region2: #{decoder_forward.12} parent=0 // pred_check
    _
  $region3: #{decoder_forward.12} parent=0 // pred_check_branch
    %11 = sbr.rel (0) target = $region5
  $region4: #{decoder_forward.12} parent=0 // pred_region
    _
  $region5: #{decoder_forward.12} parent=0 // pred_fallthru
    _
  // Predicated region
  $region6: #{decoder_forward.12} parent=0 // pred_check
    _
  $region7: #{decoder_forward.12} parent=0 // pred_check_branch
    %13 = sbr.rel (0) target = $region9
  $region8: #{decoder_forward.12} parent=0 // pred_region
    _
  $region9: #{decoder_forward.12} parent=0 // pred_fallthru
    _
  // Predicated region
  $region10: #{decoder_forward.12} parent=0 // pred_check
    _
  $region11: #{decoder_forward.12} parent=0 // pred_check_branch
    %15 = sbr.rel (0) target = $region13
  $region12: #{decoder_forward.12} parent=0 // pred_region
    _
  $region13: #{decoder_forward.12} parent=0 // pred_fallthru
    _
  // Predicated region
  $region14: #{decoder_forward.12} parent=0 // pred_check
    _
  $region15: #{decoder_forward.12} parent=0 // pred_check_branch
    %17 = sbr.rel (0) target = $region17
  $region16: #{decoder_forward.12} parent=0 // pred_region
    _
  $region17: #{decoder_forward.12} parent=0 // pred_fallthru
    _
  // Predicated region
  $region18: #{decoder_forward.12} parent=0 // pred_check
    _
  $region19: #{decoder_forward.12} parent=0 // pred_check_branch
    %19 = sbr.rel (0) target = $region21
  $region20: #{decoder_forward.12} parent=0 // pred_region
    _
  $region21: #{decoder_forward.12} parent=0 // pred_fallthru
    _
  %p22 = scmp.eq.s32.totalorder 0, 0
  // Predicated region
  $region22: #{decoder_forward.12} parent=0 // pred_check
    %p23 = pneg %p22
  $region23: #{decoder_forward.12} parent=0 // pred_check_branch
    %25 = sbr.rel (%p23) target = $region25
  $region24: #{decoder_forward.12} parent=0 // pred_region
    %vm26 = vcmask 7168
    %27 = vst.msk [vmem:[#allocation2] sm:$0xff] %vm26, -inf
    %28 = vst.msk [vmem:[#allocation2 + $0x8] sm:$0xff] %vm26, -inf
    %29 = vst.msk [vmem:[#allocation3] sm:$0xff] %vm26, 0.0
    %30 = vst.msk [vmem:[#allocation3 + $0x8] sm:$0xff] %vm26, 0.0
    %vm31 = vcmask 523264
    %32 = vst.msk [vmem:[#allocation4] sm:$0xff] %vm31, 0.0
    %33 = vst.msk [vmem:[#allocation4 + $0x8] sm:$0xff] %vm31, 0.0
  $region25: #{decoder_forward.12} parent=0 // pred_fallthru
    _
  %s34 = smul.u32 0, 128
  %s35 = smul.u32 0, 8
  %s36 = sadd.s32 %s35, 7
  %p37 = scmp.le.s32.totalorder %s34, %s36
  // Predicated region
  $region26: #{decoder_forward.12} parent=0 // pred_check
    %p38 = pneg %p37
  $region27: #{decoder_forward.12} parent=0 // pred_check_branch
    %40 = sbr.rel (%p38) target = $region29
  $region28: #{decoder_forward.12} parent=0 // pred_region
    %v41 = vld [vmem:[%s2] sm:$0xf]
    %v42 = vld [vmem:[%s2 + $0x4] sm:$0xf]
    %v43 = vmul.bf16 %v41, 1040203264
    %v44 = vmul.bf16 %v42, 1040203264
    %v45 = vld [vmem:[%s3] sm:$0xf]
    %v46 = vld [vmem:[%s3 + $0x4] sm:$0xf]
    %v47 = vld [vmem:[%s3 + $0x8] sm:$0xf]
    %v48 = vld [vmem:[%s3 + $0xc] sm:$0xf]
    %v49 = vld [vmem:[%s3 + $0x10] sm:$0xf]
    %v50 = vld [vmem:[%s3 + $0x14] sm:$0xf]
    %v51 = vld [vmem:[%s3 + $0x18] sm:$0xf]
    %v52 = vld [vmem:[%s3 + $0x1c] sm:$0xf]
    %v53 = vld [vmem:[%s3 + $0x20] sm:$0xf]
    %v54 = vld [vmem:[%s3 + $0x24] sm:$0xf]
    %v55 = vld [vmem:[%s3 + $0x28] sm:$0xf]
    %v56 = vld [vmem:[%s3 + $0x2c] sm:$0xf]
    %v57 = vld [vmem:[%s3 + $0x30] sm:$0xf]
    %v58 = vld [vmem:[%s3 + $0x34] sm:$0xf]
    %v59 = vld [vmem:[%s3 + $0x38] sm:$0xf]
    %v60 = vld [vmem:[%s3 + $0x3c] sm:$0xf]
    %v61 = vld [vmem:[%s3 + $0x40] sm:$0xf]
    %v62 = vld [vmem:[%s3 + $0x44] sm:$0xf]
    %v63 = vld [vmem:[%s3 + $0x48] sm:$0xf]
    %v64 = vld [vmem:[%s3 + $0x4c] sm:$0xf]
    %v65 = vld [vmem:[%s3 + $0x50] sm:$0xf]
    %v66 = vld [vmem:[%s3 + $0x54] sm:$0xf]
    %v67 = vld [vmem:[%s3 + $0x58] sm:$0xf]
    %v68 = vld [vmem:[%s3 + $0x5c] sm:$0xf]
    %v69 = vld [vmem:[%s3 + $0x60] sm:$0xf]
    %v70 = vld [vmem:[%s3 + $0x64] sm:$0xf]
    %v71 = vld [vmem:[%s3 + $0x68] sm:$0xf]
    %v72 = vld [vmem:[%s3 + $0x6c] sm:$0xf]
    %v73 = vld [vmem:[%s3 + $0x70] sm:$0xf]
    %v74 = vld [vmem:[%s3 + $0x74] sm:$0xf]
    %v75 = vld [vmem:[%s3 + $0x78] sm:$0xf]
    %v76 = vld [vmem:[%s3 + $0x7c] sm:$0xf]
    %v93 = vunpack.c.l.b16 %v45
    %v94 = vunpack.c.l.b16 %v46
    %v95 = vunpack.c.l.b16 %v47
    %v96 = vunpack.c.l.b16 %v48
    %v97 = vunpack.c.l.b16 %v49
    %v98 = vunpack.c.l.b16 %v50
    %v99 = vunpack.c.l.b16 %v51
    %v100 = vunpack.c.l.b16 %v52
    %v101 = vunpack.c.l.b16 %v53
    %v102 = vunpack.c.l.b16 %v54
    %v103 = vunpack.c.l.b16 %v55
    %v104 = vunpack.c.l.b16 %v56
    %v105 = vunpack.c.l.b16 %v57
    %v106 = vunpack.c.l.b16 %v58
    %v107 = vunpack.c.l.b16 %v59
    %v108 = vunpack.c.l.b16 %v60
    %v109 = vpack.c.b16 %v94, %v93
    %v110 = vpack.c.b16 %v96, %v95
    %v111 = vpack.c.b16 %v98, %v97
    %v112 = vpack.c.b16 %v100, %v99
    %v113 = vpack.c.b16 %v102, %v101
    %v114 = vpack.c.b16 %v104, %v103
    %v115 = vpack.c.b16 %v106, %v105
    %v116 = vpack.c.b16 %v108, %v107
    %vm117 = vcmask 523264
    %v119 = vsel %vm117, %v43, 0
    %v122 = vsel %vm117, %v109, 0
    %v125 = vsel %vm117, %v110, 0
    %v128 = vsel %vm117, %v111, 0
    %v131 = vsel %vm117, %v112, 0
    %v134 = vsel %vm117, %v113, 0
    %v137 = vsel %vm117, %v114, 0
    %v140 = vsel %vm117, %v115, 0
    %v143 = vsel %vm117, %v116, 0
    %145 = vmatprep.subr.bf16.mxu0 0
    %146 = vmatpush1.bf16.xpose.msra.mxu0 %v122
    %147 = vmatprep.subr.bf16.mxu0 0
    %148 = vmatpush1.bf16.xpose.msra.mxu0 %v125
    %149 = vmatprep.subr.bf16.mxu0 0
    %150 = vmatpush1.bf16.xpose.msra.mxu0 %v128
    %151 = vmatprep.subr.bf16.mxu0 0
    %152 = vmatpush1.bf16.xpose.msra.mxu0 %v131
    %153 = vmatprep.subr.bf16.mxu0 0
    %154 = vmatpush1.bf16.xpose.msra.mxu0 %v134
    %155 = vmatprep.subr.bf16.mxu0 0
    %156 = vmatpush1.bf16.xpose.msra.mxu0 %v137
    %157 = vmatprep.subr.bf16.mxu0 0
    %158 = vmatpush1.bf16.xpose.msra.mxu0 %v140
    %159 = vmatprep.subr.bf16.mxu0 0
    %160 = vmatpush1.bf16.xpose.msra.mxu0 %v143
    %161 = vmatprep.subr.bf16.mxu0 0
    %162 = vmatpush1.bf16.xpose.msra.mxu0 0
    %163 = vmatprep.subr.bf16.mxu0 0
    %164 = vmatpush1.bf16.xpose.msra.mxu0 0
    %165 = vmatprep.subr.bf16.mxu0 0
    %166 = vmatpush1.bf16.xpose.msra.mxu0 0
    %167 = vmatprep.subr.bf16.mxu0 0
    %168 = vmatpush1.bf16.xpose.msra.mxu0 0
    %169 = vmatprep.subr.bf16.mxu0 0
    %170 = vmatpush1.bf16.xpose.msra.mxu0 0
    %171 = vmatprep.subr.bf16.mxu0 0
    %172 = vmatpush1.bf16.xpose.msra.mxu0 0
    %173 = vmatprep.subr.bf16.mxu0 0
    %174 = vmatpush1.bf16.xpose.msra.mxu0 0
    %175 = vmatprep.subr.bf16.mxu0 0
    %176 = vmatpush1.bf16.xpose.msra.mxu0 0
    %177 = vmatprep.mubr.bf16.mxu0 0
    %178 = vmatmul.mubr.bf16.gmra.mrb[0].mxu0 %v119
    %v179 = vpop.f32.mrb[0].mxu0
    %v180 = vadd.f32 0.0, %v179
    %v181 = vpop.f32.mrb[0].mxu0
    %v182 = vpop.f32.mrb[0].mxu0
    %v183 = vpop.f32.mrb[0].mxu0
    %184 = vdwg.mxu0
    %v201 = vunpack.c.l.b16 %v61
    %v202 = vunpack.c.l.b16 %v62
    %v203 = vunpack.c.l.b16 %v63
    %v204 = vunpack.c.l.b16 %v64
    %v205 = vunpack.c.l.b16 %v65
    %v206 = vunpack.c.l.b16 %v66
    %v207 = vunpack.c.l.b16 %v67
    %v208 = vunpack.c.l.b16 %v68
    %v209 = vunpack.c.l.b16 %v69
    %v210 = vunpack.c.l.b16 %v70
    %v211 = vunpack.c.l.b16 %v71
    %v212 = vunpack.c.l.b16 %v72
    %v213 = vunpack.c.l.b16 %v73
    %v214 = vunpack.c.l.b16 %v74
    %v215 = vunpack.c.l.b16 %v75
    %v216 = vunpack.c.l.b16 %v76
    %v217 = vpack.c.b16 %v202, %v201
    %v218 = vpack.c.b16 %v204, %v203
    %v219 = vpack.c.b16 %v206, %v205
    %v220 = vpack.c.b16 %v208, %v207
    %v221 = vpack.c.b16 %v210, %v209
    %v222 = vpack.c.b16 %v212, %v211
    %v223 = vpack.c.b16 %v214, %v213
    %v224 = vpack.c.b16 %v216, %v215
    %v226 = vsel %vm117, %v44, 0
    %v229 = vsel %vm117, %v217, 0
    %v232 = vsel %vm117, %v218, 0
    %v235 = vsel %vm117, %v219, 0
    %v238 = vsel %vm117, %v220, 0
    %v241 = vsel %vm117, %v221, 0
    %v244 = vsel %vm117, %v222, 0
    %v247 = vsel %vm117, %v223, 0
    %v250 = vsel %vm117, %v224, 0
    %252 = vmatprep.subr.bf16.mxu0 0
    %253 = vmatpush1.bf16.xpose.msra.mxu0 %v229
    %254 = vmatprep.subr.bf16.mxu0 0
    %255 = vmatpush1.bf16.xpose.msra.mxu0 %v232
    %256 = vmatprep.subr.bf16.mxu0 0
    %257 = vmatpush1.bf16.xpose.msra.mxu0 %v235
    %258 = vmatprep.subr.bf16.mxu0 0
    %259 = vmatpush1.bf16.xpose.msra.mxu0 %v238
    %260 = vmatprep.subr.bf16.mxu0 0
    %261 = vmatpush1.bf16.xpose.msra.mxu0 %v241
    %262 = vmatprep.subr.bf16.mxu0 0
    %263 = vmatpush1.bf16.xpose.msra.mxu0 %v244
    %264 = vmatprep.subr.bf16.mxu0 0
    %265 = vmatpush1.bf16.xpose.msra.mxu0 %v247
    %266 = vmatprep.subr.bf16.mxu0 0
    %267 = vmatpush1.bf16.xpose.msra.mxu0 %v250
    %268 = vmatprep.subr.bf16.mxu0 0
    %269 = vmatpush1.bf16.xpose.msra.mxu0 0
    %270 = vmatprep.subr.bf16.mxu0 0
    %271 = vmatpush1.bf16.xpose.msra.mxu0 0
    %272 = vmatprep.subr.bf16.mxu0 0
    %273 = vmatpush1.bf16.xpose.msra.mxu0 0
    %274 = vmatprep.subr.bf16.mxu0 0
    %275 = vmatpush1.bf16.xpose.msra.mxu0 0
    %276 = vmatprep.subr.bf16.mxu0 0
    %277 = vmatpush1.bf16.xpose.msra.mxu0 0
    %278 = vmatprep.subr.bf16.mxu0 0
    %279 = vmatpush1.bf16.xpose.msra.mxu0 0
    %280 = vmatprep.subr.bf16.mxu0 0
    %281 = vmatpush1.bf16.xpose.msra.mxu0 0
    %282 = vmatprep.subr.bf16.mxu0 0
    %283 = vmatpush1.bf16.xpose.msra.mxu0 0
    %284 = vmatprep.mubr.bf16.mxu0 0
    %285 = vmatmul.mubr.bf16.gmra.mrb[0].mxu0 %v226
    %v286 = vpop.f32.mrb[0].mxu0
    %v287 = vadd.f32 0.0, %v286
    %v288 = vpop.f32.mrb[0].mxu0
    %v289 = vpop.f32.mrb[0].mxu0
    %v290 = vpop.f32.mrb[0].mxu0
    %291 = vdwg.mxu0
    %v292 = vld [vmem:[%s0] sm:$0xff]
    %v293 = vld [vmem:[%s0 + $0x8] sm:$0xff]
    %vm294 = vcmp.ne.f32.partialorder %v292, 0.0
    %vm295 = vcmp.ne.f32.partialorder %v293, 0.0
    %v296 = vld [vmem:[%s1] sm:$0x1]
    %v297 = vld [vmem:[%s1 + $0x1] sm:$0x1]
    %vm298 = vcmp.ne.f32.partialorder %v296, 0.0
    %vm299 = vcmp.ne.f32.partialorder %v297, 0.0
    %v300 = vsel %vm294, 1, 0
    %v301 = vsel %vm295, 1, 0
    %302 = vset.pattern.permute.xlu0 0
    %303 = vperm.xlu0 %302, %v300
    %v304 = vpop.permute.xlu0 %303
    %305 = vset.pattern.permute.xlu0 0
    %306 = vperm.xlu0 %305, %v301
    %v307 = vpop.permute.xlu0 %306
    %vm308 = vcmp.eq.s32.totalorder %v304, 1
    %vm309 = vcmp.eq.s32.totalorder %v307, 1
    %v310 = vsel %vm298, 1, 0
    %v311 = vsel %vm299, 1, 0
    %v312 = vlaneseq
    %v313 = vshrl.u32 %v312, 7
    %v314 = vsub.s32 0, %v313
    %v315 = vrot.slane %v310, %v314
    %v316 = vlaneseq
    %v317 = vshrl.u32 %v316, 7
    %v318 = vsub.s32 0, %v317
    %v319 = vrot.slane %v311, %v318
    %vm320 = vcmp.eq.s32.totalorder %v315, 1
    %vm321 = vcmp.eq.s32.totalorder %v319, 1
    %vm322 = vmor %vm308, %vm320
    %vm323 = vmor %vm309, %vm321
    %v324 = vlaneseq
    %v325 = vshrl.u32 %v324, 7
    %v326 = vstv %s35
    %v327 = vadd.s32 %v326, %v325
    %v328 = vlaneseq
    %v329 = vand.u32 %v328, 127
    %v330 = vstv %s34
    %v331 = vadd.s32 %v330, %v329
    %vm332 = vcmp.gt.s32.totalorder %v331, %v327
    %v333 = vsel %vm332, 1, 0
    %vm334 = vcmp.eq.s32.totalorder %v333, 1
    %vm335 = vmor %vm322, %vm334
    %vm336 = vmor %vm323, %vm334
    %v337 = vsel %vm335, -1e+09, %v180
    %v338 = vsel %vm336, -1e+09, %v287
    %v339 = vld [vmem:[#allocation2] sm:$0xff]
    %v340 = vld [vmem:[#allocation2 + $0x8] sm:$0xff]
    %341 = vmax.xlane.f32.xlu0 %v337
    %v342 = vpop.xlane.xlu0 %341
    %343 = vmax.xlane.f32.xlu0 %v338
    %v344 = vpop.xlane.xlu0 %343
    %v345 = vmax.f32 %v339, %v342
    %v346 = vmax.f32 %v340, %v344
    %v347 = vsub.f32 %v339, %v345
    %v348 = vsub.f32 %v340, %v346
    %v349 = vmul.f32 %v347, 1.442695
    %v350 = vpow.pop %v349
    %v351 = vmul.f32 %v348, 1.442695
    %v352 = vpow.pop %v351
    %354 = vset.pattern.permute.xlu0 0
    %355 = vperm.xlu0 %354, %v345
    %v356 = vpop.permute.xlu0 %355
    %359 = vset.pattern.permute.xlu0 0
    %360 = vperm.xlu0 %359, %v346
    %v361 = vpop.permute.xlu0 %360
    %v363 = vsub.f32 %v337, %v356
    %v364 = vsub.f32 %v338, %v361
    %v365 = vmul.f32 %v363, 1.442695
    %v366 = vpow.pop %v365
    %v367 = vmul.f32 %v364, 1.442695
    %v368 = vpow.pop %v367
    %v369 = vld [vmem:[#allocation3] sm:$0xff]
    %v370 = vld [vmem:[#allocation3 + $0x8] sm:$0xff]
    %v371 = vmul.f32 %v350, %v369
    %v372 = vmul.f32 %v352, %v370
    %373 = vadd.xlane.f32.xlu0 %v366
    %v374 = vpop.xlane.xlu0 %373
    %375 = vadd.xlane.f32.xlu0 %v368
    %v376 = vpop.xlane.xlu0 %375
    %v377 = vadd.f32 %v371, %v374
    %v378 = vadd.f32 %v372, %v376
    %vm379 = vcmask 7168
    %380 = vst.msk [vmem:[#allocation3] sm:$0xff] %vm379, %v377
    %381 = vst.msk [vmem:[#allocation3 + $0x8] sm:$0xff] %vm379, %v378
    %v382 = vsel %vm335, 0.0, %v366
    %v383 = vsel %vm336, 0.0, %v368
    %v384 = vld [vmem:[#allocation4] sm:$0xff]
    %v385 = vld [vmem:[#allocation4 + $0x8] sm:$0xff]
    %387 = vset.pattern.permute.xlu0 0
    %388 = vperm.xlu0 %387, %v350
    %v389 = vpop.permute.xlu0 %388
    %392 = vset.pattern.permute.xlu0 0
    %393 = vperm.xlu0 %392, %v352
    %v394 = vpop.permute.xlu0 %393
    %v396 = vmul.f32 %v389, %v384
    %v397 = vmul.f32 %v394, %v385
    %v398 = vpack.c.bf16 %v382, %v382
    %v399 = vpack.c.bf16 %v383, %v383
    %v400 = vld [vmem:[%s4] sm:$0xf]
    %v401 = vld [vmem:[%s4 + $0x4] sm:$0xf]
    %v402 = vld [vmem:[%s4 + $0x8] sm:$0xf]
    %v403 = vld [vmem:[%s4 + $0xc] sm:$0xf]
    %v404 = vld [vmem:[%s4 + $0x10] sm:$0xf]
    %v405 = vld [vmem:[%s4 + $0x14] sm:$0xf]
    %v406 = vld [vmem:[%s4 + $0x18] sm:$0xf]
    %v407 = vld [vmem:[%s4 + $0x1c] sm:$0xf]
    %v408 = vld [vmem:[%s4 + $0x20] sm:$0xf]
    %v409 = vld [vmem:[%s4 + $0x24] sm:$0xf]
    %v410 = vld [vmem:[%s4 + $0x28] sm:$0xf]
    %v411 = vld [vmem:[%s4 + $0x2c] sm:$0xf]
    %v412 = vld [vmem:[%s4 + $0x30] sm:$0xf]
    %v413 = vld [vmem:[%s4 + $0x34] sm:$0xf]
    %v414 = vld [vmem:[%s4 + $0x38] sm:$0xf]
    %v415 = vld [vmem:[%s4 + $0x3c] sm:$0xf]
    %v416 = vld [vmem:[%s4 + $0x40] sm:$0xf]
    %v417 = vld [vmem:[%s4 + $0x44] sm:$0xf]
    %v418 = vld [vmem:[%s4 + $0x48] sm:$0xf]
    %v419 = vld [vmem:[%s4 + $0x4c] sm:$0xf]
    %v420 = vld [vmem:[%s4 + $0x50] sm:$0xf]
    %v421 = vld [vmem:[%s4 + $0x54] sm:$0xf]
    %v422 = vld [vmem:[%s4 + $0x58] sm:$0xf]
    %v423 = vld [vmem:[%s4 + $0x5c] sm:$0xf]
    %v424 = vld [vmem:[%s4 + $0x60] sm:$0xf]
    %v425 = vld [vmem:[%s4 + $0x64] sm:$0xf]
    %v426 = vld [vmem:[%s4 + $0x68] sm:$0xf]
    %v427 = vld [vmem:[%s4 + $0x6c] sm:$0xf]
    %v428 = vld [vmem:[%s4 + $0x70] sm:$0xf]
    %v429 = vld [vmem:[%s4 + $0x74] sm:$0xf]
    %v430 = vld [vmem:[%s4 + $0x78] sm:$0xf]
    %v431 = vld [vmem:[%s4 + $0x7c] sm:$0xf]
    %v448 = vunpack.c.l.b16 %v400
    %v449 = vunpack.c.l.b16 %v401
    %v450 = vunpack.c.l.b16 %v402
    %v451 = vunpack.c.l.b16 %v403
    %v452 = vunpack.c.l.b16 %v404
    %v453 = vunpack.c.l.b16 %v405
    %v454 = vunpack.c.l.b16 %v406
    %v455 = vunpack.c.l.b16 %v407
    %v456 = vunpack.c.l.b16 %v408
    %v457 = vunpack.c.l.b16 %v409
    %v458 = vunpack.c.l.b16 %v410
    %v459 = vunpack.c.l.b16 %v411
    %v460 = vunpack.c.l.b16 %v412
    %v461 = vunpack.c.l.b16 %v413
    %v462 = vunpack.c.l.b16 %v414
    %v463 = vunpack.c.l.b16 %v415
    %v464 = vpack.c.b16 %v449, %v448
    %v465 = vpack.c.b16 %v451, %v450
    %v466 = vpack.c.b16 %v453, %v452
    %v467 = vpack.c.b16 %v455, %v454
    %v468 = vpack.c.b16 %v457, %v456
    %v469 = vpack.c.b16 %v459, %v458
    %v470 = vpack.c.b16 %v461, %v460
    %v471 = vpack.c.b16 %v463, %v462
    %480 = vmatprep.subr.bf16.mxu0 0
    %481 = vmatpush1.bf16.msra.mxu0 %v464
    %482 = vmatprep.subr.bf16.mxu0 0
    %483 = vmatpush1.bf16.msra.mxu0 %v465
    %484 = vmatprep.subr.bf16.mxu0 0
    %485 = vmatpush1.bf16.msra.mxu0 %v466
    %486 = vmatprep.subr.bf16.mxu0 0
    %487 = vmatpush1.bf16.msra.mxu0 %v467
    %488 = vmatprep.subr.bf16.mxu0 0
    %489 = vmatpush1.bf16.msra.mxu0 %v468
    %490 = vmatprep.subr.bf16.mxu0 0
    %491 = vmatpush1.bf16.msra.mxu0 %v469
    %492 = vmatprep.subr.bf16.mxu0 0
    %493 = vmatpush1.bf16.msra.mxu0 %v470
    %494 = vmatprep.subr.bf16.mxu0 0
    %495 = vmatpush1.bf16.msra.mxu0 %v471
    %496 = vmatprep.subr.bf16.mxu0 0
    %497 = vmatpush1.bf16.msra.mxu0 0
    %498 = vmatprep.subr.bf16.mxu0 0
    %499 = vmatpush1.bf16.msra.mxu0 0
    %500 = vmatprep.subr.bf16.mxu0 0
    %501 = vmatpush1.bf16.msra.mxu0 0
    %502 = vmatprep.subr.bf16.mxu0 0
    %503 = vmatpush1.bf16.msra.mxu0 0
    %504 = vmatprep.subr.bf16.mxu0 0
    %505 = vmatpush1.bf16.msra.mxu0 0
    %506 = vmatprep.subr.bf16.mxu0 0
    %507 = vmatpush1.bf16.msra.mxu0 0
    %508 = vmatprep.subr.bf16.mxu0 0
    %509 = vmatpush1.bf16.msra.mxu0 0
    %510 = vmatprep.subr.bf16.mxu0 0
    %511 = vmatpush1.bf16.msra.mxu0 0
    %512 = vmatprep.mubr.bf16.mxu0 0
    %513 = vmatmul.mubr.bf16.gmra.mrb[0].mxu0 %v398
    %v514 = vpop.f32.mrb[0].mxu0
    %v515 = vadd.f32 0.0, %v514
    %v516 = vpop.f32.mrb[0].mxu0
    %v517 = vpop.f32.mrb[0].mxu0
    %v518 = vpop.f32.mrb[0].mxu0
    %519 = vdwg.mxu0
    %v536 = vunpack.c.l.b16 %v416
    %v537 = vunpack.c.l.b16 %v417
    %v538 = vunpack.c.l.b16 %v418
    %v539 = vunpack.c.l.b16 %v419
    %v540 = vunpack.c.l.b16 %v420
    %v541 = vunpack.c.l.b16 %v421
    %v542 = vunpack.c.l.b16 %v422
    %v543 = vunpack.c.l.b16 %v423
    %v544 = vunpack.c.l.b16 %v424
    %v545 = vunpack.c.l.b16 %v425
    %v546 = vunpack.c.l.b16 %v426
    %v547 = vunpack.c.l.b16 %v427
    %v548 = vunpack.c.l.b16 %v428
    %v549 = vunpack.c.l.b16 %v429
    %v550 = vunpack.c.l.b16 %v430
    %v551 = vunpack.c.l.b16 %v431
    %v552 = vpack.c.b16 %v537, %v536
    %v553 = vpack.c.b16 %v539, %v538
    %v554 = vpack.c.b16 %v541, %v540
    %v555 = vpack.c.b16 %v543, %v542
    %v556 = vpack.c.b16 %v545, %v544
    %v557 = vpack.c.b16 %v547, %v546
    %v558 = vpack.c.b16 %v549, %v548
    %v559 = vpack.c.b16 %v551, %v550
    %568 = vmatprep.subr.bf16.mxu0 0
    %569 = vmatpush1.bf16.msra.mxu0 %v552
    %570 = vmatprep.subr.bf16.mxu0 0
    %571 = vmatpush1.bf16.msra.mxu0 %v553
    %572 = vmatprep.subr.bf16.mxu0 0
    %573 = vmatpush1.bf16.msra.mxu0 %v554
    %574 = vmatprep.subr.bf16.mxu0 0
    %575 = vmatpush1.bf16.msra.mxu0 %v555
    %576 = vmatprep.subr.bf16.mxu0 0
    %577 = vmatpush1.bf16.msra.mxu0 %v556
    %578 = vmatprep.subr.bf16.mxu0 0
    %579 = vmatpush1.bf16.msra.mxu0 %v557
    %580 = vmatprep.subr.bf16.mxu0 0
    %581 = vmatpush1.bf16.msra.mxu0 %v558
    %582 = vmatprep.subr.bf16.mxu0 0
    %583 = vmatpush1.bf16.msra.mxu0 %v559
    %584 = vmatprep.subr.bf16.mxu0 0
    %585 = vmatpush1.bf16.msra.mxu0 0
    %586 = vmatprep.subr.bf16.mxu0 0
    %587 = vmatpush1.bf16.msra.mxu0 0
    %588 = vmatprep.subr.bf16.mxu0 0
    %589 = vmatpush1.bf16.msra.mxu0 0
    %590 = vmatprep.subr.bf16.mxu0 0
    %591 = vmatpush1.bf16.msra.mxu0 0
    %592 = vmatprep.subr.bf16.mxu0 0
    %593 = vmatpush1.bf16.msra.mxu0 0
    %594 = vmatprep.subr.bf16.mxu0 0
    %595 = vmatpush1.bf16.msra.mxu0 0
    %596 = vmatprep.subr.bf16.mxu0 0
    %597 = vmatpush1.bf16.msra.mxu0 0
    %598 = vmatprep.subr.bf16.mxu0 0
    %599 = vmatpush1.bf16.msra.mxu0 0
    %600 = vmatprep.mubr.bf16.mxu0 0
    %601 = vmatmul.mubr.bf16.gmra.mrb[0].mxu0 %v399
    %v602 = vpop.f32.mrb[0].mxu0
    %v603 = vadd.f32 0.0, %v602
    %v604 = vpop.f32.mrb[0].mxu0
    %v605 = vpop.f32.mrb[0].mxu0
    %v606 = vpop.f32.mrb[0].mxu0
    %607 = vdwg.mxu0
    %v608 = vadd.f32 %v396, %v515
    %v609 = vadd.f32 %v397, %v603
    %610 = vst.msk [vmem:[#allocation4] sm:$0xff] %vm117, %v608
    %611 = vst.msk [vmem:[#allocation4 + $0x8] sm:$0xff] %vm117, %v609
    %612 = vst.msk [vmem:[#allocation2] sm:$0xff] %vm379, %v345
    %613 = vst.msk [vmem:[#allocation2 + $0x8] sm:$0xff] %vm379, %v346
  $region29: #{decoder_forward.12} parent=0 // pred_fallthru
    _
  // Predicated region
  $region30: #{decoder_forward.12} parent=0 // pred_check
    %p614 = pneg %p22
  $region31: #{decoder_forward.12} parent=0 // pred_check_branch
    %616 = sbr.rel (%p614) target = $region33
  $region32: #{decoder_forward.12} parent=0 // pred_region
    %v617 = vld [vmem:[#allocation3] sm:$0xff]
    %v618 = vld [vmem:[#allocation3 + $0x8] sm:$0xff]
    %v619 = vrcp.pop %v617
    %v620 = vrcp.pop %v618
    %v621 = vld [vmem:[#allocation4] sm:$0xff]
    %v622 = vld [vmem:[#allocation4 + $0x8] sm:$0xff]
    %624 = vset.pattern.permute.xlu0 0
    %625 = vperm.xlu0 %624, %v619
    %v626 = vpop.permute.xlu0 %625
    %629 = vset.pattern.permute.xlu0 0
    %630 = vperm.xlu0 %629, %v620
    %v631 = vpop.permute.xlu0 %630
    %v633 = vmul.f32 %v621, %v626
    %v634 = vmul.f32 %v622, %v631
    %636 = vrot.lane.b32.xlu0 %v634, 64
    %v637 = vpop.permute.xlu0 %636
    %vm639 = vcmask 523264
    %v640 = vsel %vm639, %v633, %v637
    %641 = vst [vmem:[%s5] sm:$0xff] %v640
  $region33: #{decoder_forward.12} parent=0 // pred_fallthru
    _
  // Predicated region
  $region34: #{decoder_forward.12} parent=0 // pred_check
    _
  $region35: #{decoder_forward.12} parent=0 // pred_check_branch
    %643 = sbr.rel (0) target = $region37
  $region36: #{decoder_forward.12} parent=0 // pred_region
    _
  $region37: #{decoder_forward.12} parent=0 // pred_fallthru
    _
  // Predicated region
  $region38: #{decoder_forward.12} parent=0 // pred_check
    _
  $region39: #{decoder_forward.12} parent=0 // pred_check_branch
    %645 = sbr.rel (0) target = $region41
  $region40: #{decoder_forward.12} parent=0 // pred_region
    _
  $region41: #{decoder_forward.12} parent=0 // pred_fallthru
    _

// kernel: decoder_forward.13
$region0: #{decoder_forward.13}
  #allocation0 [shape = 'u32[]', space=smem, size = 0x4, offset = 0x4, fixed_abs, tag = 'smem constant byte address 0x4 - core index']
  #allocation1 [shape = 'u32[144,128]{1,0:T(1,128)}', space=vmem, size = 0x12000, scoped, tag = 'internal scratch']
  #allocation2 [shape = 'f32[2,8,1]{2,1,0:T(8,128)}', space=vmem, size = 0x2000, scoped, tag = 'scratch operand']
  #allocation3 [shape = 'f32[2,8,1]{2,1,0:T(8,128)}', space=vmem, size = 0x2000, scoped, tag = 'scratch operand']
  #allocation4 [shape = 'f32[2,8,64]{2,1,0:T(8,128)}', space=vmem, size = 0x2000, scoped, tag = 'scratch operand']
  %s0 = inlined_call_operand.vmem [shape: f32[2,8,1], index: 0, kind: input, shape index: {}]
  %s1 = inlined_call_operand.vmem [shape: f32[2,1,128], index: 1, kind: input, shape index: {}]
  %s2 = inlined_call_operand.vmem [shape: bf16[2,8,64], index: 2, kind: input, shape index: {}]
  %s3 = inlined_call_operand.vmem [shape: bf16[2,128,64], index: 3, kind: input, shape index: {}]
  %s4 = inlined_call_operand.vmem [shape: bf16[2,128,64], index: 4, kind: input, shape index: {}]
  %s5 = inlined_call_operand.vmem [shape: f32[1,8,128], index: 5, kind: output, shape index: {}]
  %s6 = sld [smem:[#allocation0]]
  $region38: #{decoder_forward.13} parent=0
    _
  %s8 = ssub.s32 1, %s6
  %s9 = scalar_select 0, %s8, %s6
  // Predicated region
  $region2: #{decoder_forward.13} parent=0 // pred_check
    _
  $region3: #{decoder_forward.13} parent=0 // pred_check_branch
    %11 = sbr.rel (0) target = $region5
  $region4: #{decoder_forward.13} parent=0 // pred_region
    _
  $region5: #{decoder_forward.13} parent=0 // pred_fallthru
    _
  // Predicated region
  $region6: #{decoder_forward.13} parent=0 // pred_check
    _
  $region7: #{decoder_forward.13} parent=0 // pred_check_branch
    %13 = sbr.rel (0) target = $region9
  $region8: #{decoder_forward.13} parent=0 // pred_region
    _
  $region9: #{decoder_forward.13} parent=0 // pred_fallthru
    _
  // Predicated region
  $region10: #{decoder_forward.13} parent=0 // pred_check
    _
  $region11: #{decoder_forward.13} parent=0 // pred_check_branch
    %15 = sbr.rel (0) target = $region13
  $region12: #{decoder_forward.13} parent=0 // pred_region
    _
  $region13: #{decoder_forward.13} parent=0 // pred_fallthru
    _
  // Predicated region
  $region14: #{decoder_forward.13} parent=0 // pred_check
    _
  $region15: #{decoder_forward.13} parent=0 // pred_check_branch
    %17 = sbr.rel (0) target = $region17
  $region16: #{decoder_forward.13} parent=0 // pred_region
    _
  $region17: #{decoder_forward.13} parent=0 // pred_fallthru
    _
  // Predicated region
  $region18: #{decoder_forward.13} parent=0 // pred_check
    _
  $region19: #{decoder_forward.13} parent=0 // pred_check_branch
    %19 = sbr.rel (0) target = $region21
  $region20: #{decoder_forward.13} parent=0 // pred_region
    _
  $region21: #{decoder_forward.13} parent=0 // pred_fallthru
    _
  %p22 = scmp.eq.s32.totalorder 0, 0
  // Predicated region
  $region22: #{decoder_forward.13} parent=0 // pred_check
    %p23 = pneg %p22
  $region23: #{decoder_forward.13} parent=0 // pred_check_branch
    %25 = sbr.rel (%p23) target = $region25
  $region24: #{decoder_forward.13} parent=0 // pred_region
    %vm26 = vcmask 7168
    %27 = vst.msk [vmem:[#allocation2] sm:$0xff] %vm26, -inf
    %28 = vst.msk [vmem:[#allocation2 + $0x8] sm:$0xff] %vm26, -inf
    %29 = vst.msk [vmem:[#allocation3] sm:$0xff] %vm26, 0.0
    %30 = vst.msk [vmem:[#allocation3 + $0x8] sm:$0xff] %vm26, 0.0
    %vm31 = vcmask 523264
    %32 = vst.msk [vmem:[#allocation4] sm:$0xff] %vm31, 0.0
    %33 = vst.msk [vmem:[#allocation4 + $0x8] sm:$0xff] %vm31, 0.0
  $region25: #{decoder_forward.13} parent=0 // pred_fallthru
    _
  %v34 = vld [vmem:[%s2] sm:$0xf]
  %v35 = vld [vmem:[%s2 + $0x4] sm:$0xf]
  %v36 = vmul.bf16 %v34, 1040203264
  %v37 = vmul.bf16 %v35, 1040203264
  %v38 = vld [vmem:[%s3] sm:$0xf]
  %v39 = vld [vmem:[%s3 + $0x4] sm:$0xf]
  %v40 = vld [vmem:[%s3 + $0x8] sm:$0xf]
  %v41 = vld [vmem:[%s3 + $0xc] sm:$0xf]
  %v42 = vld [vmem:[%s3 + $0x10] sm:$0xf]
  %v43 = vld [vmem:[%s3 + $0x14] sm:$0xf]
  %v44 = vld [vmem:[%s3 + $0x18] sm:$0xf]
  %v45 = vld [vmem:[%s3 + $0x1c] sm:$0xf]
  %v46 = vld [vmem:[%s3 + $0x20] sm:$0xf]
  %v47 = vld [vmem:[%s3 + $0x24] sm:$0xf]
  %v48 = vld [vmem:[%s3 + $0x28] sm:$0xf]
  %v49 = vld [vmem:[%s3 + $0x2c] sm:$0xf]
  %v50 = vld [vmem:[%s3 + $0x30] sm:$0xf]
  %v51 = vld [vmem:[%s3 + $0x34] sm:$0xf]
  %v52 = vld [vmem:[%s3 + $0x38] sm:$0xf]
  %v53 = vld [vmem:[%s3 + $0x3c] sm:$0xf]
  %v54 = vld [vmem:[%s3 + $0x40] sm:$0xf]
  %v55 = vld [vmem:[%s3 + $0x44] sm:$0xf]
  %v56 = vld [vmem:[%s3 + $0x48] sm:$0xf]
  %v57 = vld [vmem:[%s3 + $0x4c] sm:$0xf]
  %v58 = vld [vmem:[%s3 + $0x50] sm:$0xf]
  %v59 = vld [vmem:[%s3 + $0x54] sm:$0xf]
  %v60 = vld [vmem:[%s3 + $0x58] sm:$0xf]
  %v61 = vld [vmem:[%s3 + $0x5c] sm:$0xf]
  %v62 = vld [vmem:[%s3 + $0x60] sm:$0xf]
  %v63 = vld [vmem:[%s3 + $0x64] sm:$0xf]
  %v64 = vld [vmem:[%s3 + $0x68] sm:$0xf]
  %v65 = vld [vmem:[%s3 + $0x6c] sm:$0xf]
  %v66 = vld [vmem:[%s3 + $0x70] sm:$0xf]
  %v67 = vld [vmem:[%s3 + $0x74] sm:$0xf]
  %v68 = vld [vmem:[%s3 + $0x78] sm:$0xf]
  %v69 = vld [vmem:[%s3 + $0x7c] sm:$0xf]
  %v86 = vunpack.c.l.b16 %v38
  %v87 = vunpack.c.l.b16 %v39
  %v88 = vunpack.c.l.b16 %v40
  %v89 = vunpack.c.l.b16 %v41
  %v90 = vunpack.c.l.b16 %v42
  %v91 = vunpack.c.l.b16 %v43
  %v92 = vunpack.c.l.b16 %v44
  %v93 = vunpack.c.l.b16 %v45
  %v94 = vunpack.c.l.b16 %v46
  %v95 = vunpack.c.l.b16 %v47
  %v96 = vunpack.c.l.b16 %v48
  %v97 = vunpack.c.l.b16 %v49
  %v98 = vunpack.c.l.b16 %v50
  %v99 = vunpack.c.l.b16 %v51
  %v100 = vunpack.c.l.b16 %v52
  %v101 = vunpack.c.l.b16 %v53
  %v102 = vpack.c.b16 %v87, %v86
  %v103 = vpack.c.b16 %v89, %v88
  %v104 = vpack.c.b16 %v91, %v90
  %v105 = vpack.c.b16 %v93, %v92
  %v106 = vpack.c.b16 %v95, %v94
  %v107 = vpack.c.b16 %v97, %v96
  %v108 = vpack.c.b16 %v99, %v98
  %v109 = vpack.c.b16 %v101, %v100
  %vm110 = vcmask 523264
  %v112 = vsel %vm110, %v36, 0
  %v115 = vsel %vm110, %v102, 0
  %v118 = vsel %vm110, %v103, 0
  %v121 = vsel %vm110, %v104, 0
  %v124 = vsel %vm110, %v105, 0
  %v127 = vsel %vm110, %v106, 0
  %v130 = vsel %vm110, %v107, 0
  %v133 = vsel %vm110, %v108, 0
  %v136 = vsel %vm110, %v109, 0
  %138 = vmatprep.subr.bf16.mxu0 0
  %139 = vmatpush1.bf16.xpose.msra.mxu0 %v115
  %140 = vmatprep.subr.bf16.mxu0 0
  %141 = vmatpush1.bf16.xpose.msra.mxu0 %v118
  %142 = vmatprep.subr.bf16.mxu0 0
  %143 = vmatpush1.bf16.xpose.msra.mxu0 %v121
  %144 = vmatprep.subr.bf16.mxu0 0
  %145 = vmatpush1.bf16.xpose.msra.mxu0 %v124
  %146 = vmatprep.subr.bf16.mxu0 0
  %147 = vmatpush1.bf16.xpose.msra.mxu0 %v127
  %148 = vmatprep.subr.bf16.mxu0 0
  %149 = vmatpush1.bf16.xpose.msra.mxu0 %v130
  %150 = vmatprep.subr.bf16.mxu0 0
  %151 = vmatpush1.bf16.xpose.msra.mxu0 %v133
  %152 = vmatprep.subr.bf16.mxu0 0
  %153 = vmatpush1.bf16.xpose.msra.mxu0 %v136
  %154 = vmatprep.subr.bf16.mxu0 0
  %155 = vmatpush1.bf16.xpose.msra.mxu0 0
  %156 = vmatprep.subr.bf16.mxu0 0
  %157 = vmatpush1.bf16.xpose.msra.mxu0 0
  %158 = vmatprep.subr.bf16.mxu0 0
  %159 = vmatpush1.bf16.xpose.msra.mxu0 0
  %160 = vmatprep.subr.bf16.mxu0 0
  %161 = vmatpush1.bf16.xpose.msra.mxu0 0
  %162 = vmatprep.subr.bf16.mxu0 0
  %163 = vmatpush1.bf16.xpose.msra.mxu0 0
  %164 = vmatprep.subr.bf16.mxu0 0
  %165 = vmatpush1.bf16.xpose.msra.mxu0 0
  %166 = vmatprep.subr.bf16.mxu0 0
  %167 = vmatpush1.bf16.xpose.msra.mxu0 0
  %168 = vmatprep.subr.bf16.mxu0 0
  %169 = vmatpush1.bf16.xpose.msra.mxu0 0
  %170 = vmatprep.mubr.bf16.mxu0 0
  %171 = vmatmul.mubr.bf16.gmra.mrb[0].mxu0 %v112
  %v172 = vpop.f32.mrb[0].mxu0
  %v173 = vadd.f32 0.0, %v172
  %v174 = vpop.f32.mrb[0].mxu0
  %v175 = vpop.f32.mrb[0].mxu0
  %v176 = vpop.f32.mrb[0].mxu0
  %177 = vdwg.mxu0
  %v194 = vunpack.c.l.b16 %v54
  %v195 = vunpack.c.l.b16 %v55
  %v196 = vunpack.c.l.b16 %v56
  %v197 = vunpack.c.l.b16 %v57
  %v198 = vunpack.c.l.b16 %v58
  %v199 = vunpack.c.l.b16 %v59
  %v200 = vunpack.c.l.b16 %v60
  %v201 = vunpack.c.l.b16 %v61
  %v202 = vunpack.c.l.b16 %v62
  %v203 = vunpack.c.l.b16 %v63
  %v204 = vunpack.c.l.b16 %v64
  %v205 = vunpack.c.l.b16 %v65
  %v206 = vunpack.c.l.b16 %v66
  %v207 = vunpack.c.l.b16 %v67
  %v208 = vunpack.c.l.b16 %v68
  %v209 = vunpack.c.l.b16 %v69
  %v210 = vpack.c.b16 %v195, %v194
  %v211 = vpack.c.b16 %v197, %v196
  %v212 = vpack.c.b16 %v199, %v198
  %v213 = vpack.c.b16 %v201, %v200
  %v214 = vpack.c.b16 %v203, %v202
  %v215 = vpack.c.b16 %v205, %v204
  %v216 = vpack.c.b16 %v207, %v206
  %v217 = vpack.c.b16 %v209, %v208
  %v219 = vsel %vm110, %v37, 0
  %v222 = vsel %vm110, %v210, 0
  %v225 = vsel %vm110, %v211, 0
  %v228 = vsel %vm110, %v212, 0
  %v231 = vsel %vm110, %v213, 0
  %v234 = vsel %vm110, %v214, 0
  %v237 = vsel %vm110, %v215, 0
  %v240 = vsel %vm110, %v216, 0
  %v243 = vsel %vm110, %v217, 0
  %245 = vmatprep.subr.bf16.mxu0 0
  %246 = vmatpush1.bf16.xpose.msra.mxu0 %v222
  %247 = vmatprep.subr.bf16.mxu0 0
  %248 = vmatpush1.bf16.xpose.msra.mxu0 %v225
  %249 = vmatprep.subr.bf16.mxu0 0
  %250 = vmatpush1.bf16.xpose.msra.mxu0 %v228
  %251 = vmatprep.subr.bf16.mxu0 0
  %252 = vmatpush1.bf16.xpose.msra.mxu0 %v231
  %253 = vmatprep.subr.bf16.mxu0 0
  %254 = vmatpush1.bf16.xpose.msra.mxu0 %v234
  %255 = vmatprep.subr.bf16.mxu0 0
  %256 = vmatpush1.bf16.xpose.msra.mxu0 %v237
  %257 = vmatprep.subr.bf16.mxu0 0
  %258 = vmatpush1.bf16.xpose.msra.mxu0 %v240
  %259 = vmatprep.subr.bf16.mxu0 0
  %260 = vmatpush1.bf16.xpose.msra.mxu0 %v243
  %261 = vmatprep.subr.bf16.mxu0 0
  %262 = vmatpush1.bf16.xpose.msra.mxu0 0
  %263 = vmatprep.subr.bf16.mxu0 0
  %264 = vmatpush1.bf16.xpose.msra.mxu0 0
  %265 = vmatprep.subr.bf16.mxu0 0
  %266 = vmatpush1.bf16.xpose.msra.mxu0 0
  %267 = vmatprep.subr.bf16.mxu0 0
  %268 = vmatpush1.bf16.xpose.msra.mxu0 0
  %269 = vmatprep.subr.bf16.mxu0 0
  %270 = vmatpush1.bf16.xpose.msra.mxu0 0
  %271 = vmatprep.subr.bf16.mxu0 0
  %272 = vmatpush1.bf16.xpose.msra.mxu0 0
  %273 = vmatprep.subr.bf16.mxu0 0
  %274 = vmatpush1.bf16.xpose.msra.mxu0 0
  %275 = vmatprep.subr.bf16.mxu0 0
  %276 = vmatpush1.bf16.xpose.msra.mxu0 0
  %277 = vmatprep.mubr.bf16.mxu0 0
  %278 = vmatmul.mubr.bf16.gmra.mrb[0].mxu0 %v219
  %v279 = vpop.f32.mrb[0].mxu0
  %v280 = vadd.f32 0.0, %v279
  %v281 = vpop.f32.mrb[0].mxu0
  %v282 = vpop.f32.mrb[0].mxu0
  %v283 = vpop.f32.mrb[0].mxu0
  %284 = vdwg.mxu0
  %v285 = vld [vmem:[%s0] sm:$0xff]
  %v286 = vld [vmem:[%s0 + $0x8] sm:$0xff]
  %vm287 = vcmp.ne.f32.partialorder %v285, 0.0
  %vm288 = vcmp.ne.f32.partialorder %v286, 0.0
  %v289 = vld [vmem:[%s1] sm:$0x1]
  %v290 = vld [vmem:[%s1 + $0x1] sm:$0x1]
  %vm291 = vcmp.ne.f32.partialorder %v289, 0.0
  %vm292 = vcmp.ne.f32.partialorder %v290, 0.0
  %v293 = vsel %vm287, 1, 0
  %v294 = vsel %vm288, 1, 0
  %295 = vset.pattern.permute.xlu0 0
  %296 = vperm.xlu0 %295, %v293
  %v297 = vpop.permute.xlu0 %296
  %298 = vset.pattern.permute.xlu0 0
  %299 = vperm.xlu0 %298, %v294
  %v300 = vpop.permute.xlu0 %299
  %vm301 = vcmp.eq.s32.totalorder %v297, 1
  %vm302 = vcmp.eq.s32.totalorder %v300, 1
  %v303 = vsel %vm291, 1, 0
  %v304 = vsel %vm292, 1, 0
  %v305 = vlaneseq
  %v306 = vshrl.u32 %v305, 7
  %v307 = vsub.s32 0, %v306
  %v308 = vrot.slane %v303, %v307
  %v309 = vlaneseq
  %v310 = vshrl.u32 %v309, 7
  %v311 = vsub.s32 0, %v310
  %v312 = vrot.slane %v304, %v311
  %vm313 = vcmp.eq.s32.totalorder %v308, 1
  %vm314 = vcmp.eq.s32.totalorder %v312, 1
  %vm315 = vmor %vm301, %vm313
  %vm316 = vmor %vm302, %vm314
  %v317 = vsel %vm315, -1e+09, %v173
  %v318 = vsel %vm316, -1e+09, %v280
  %v319 = vld [vmem:[#allocation2] sm:$0xff]
  %v320 = vld [vmem:[#allocation2 + $0x8] sm:$0xff]
  %321 = vmax.xlane.f32.xlu0 %v317
  %v322 = vpop.xlane.xlu0 %321
  %323 = vmax.xlane.f32.xlu0 %v318
  %v324 = vpop.xlane.xlu0 %323
  %v325 = vmax.f32 %v319, %v322
  %v326 = vmax.f32 %v320, %v324
  %v327 = vsub.f32 %v319, %v325
  %v328 = vsub.f32 %v320, %v326
  %v329 = vmul.f32 %v327, 1.442695
  %v330 = vpow.pop %v329
  %v331 = vmul.f32 %v328, 1.442695
  %v332 = vpow.pop %v331
  %334 = vset.pattern.permute.xlu0 0
  %335 = vperm.xlu0 %334, %v325
  %v336 = vpop.permute.xlu0 %335
  %339 = vset.pattern.permute.xlu0 0
  %340 = vperm.xlu0 %339, %v326
  %v341 = vpop.permute.xlu0 %340
  %v343 = vsub.f32 %v317, %v336
  %v344 = vsub.f32 %v318, %v341
  %v345 = vmul.f32 %v343, 1.442695
  %v346 = vpow.pop %v345
  %v347 = vmul.f32 %v344, 1.442695
  %v348 = vpow.pop %v347
  %v349 = vld [vmem:[#allocation3] sm:$0xff]
  %v350 = vld [vmem:[#allocation3 + $0x8] sm:$0xff]
  %v351 = vmul.f32 %v330, %v349
  %v352 = vmul.f32 %v332, %v350
  %353 = vadd.xlane.f32.xlu0 %v346
  %v354 = vpop.xlane.xlu0 %353
  %355 = vadd.xlane.f32.xlu0 %v348
  %v356 = vpop.xlane.xlu0 %355
  %v357 = vadd.f32 %v351, %v354
  %v358 = vadd.f32 %v352, %v356
  %vm359 = vcmask 7168
  %360 = vst.msk [vmem:[#allocation3] sm:$0xff] %vm359, %v357
  %361 = vst.msk [vmem:[#allocation3 + $0x8] sm:$0xff] %vm359, %v358
  %v362 = vsel %vm315, 0.0, %v346
  %v363 = vsel %vm316, 0.0, %v348
  %v364 = vld [vmem:[#allocation4] sm:$0xff]
  %v365 = vld [vmem:[#allocation4 + $0x8] sm:$0xff]
  %367 = vset.pattern.permute.xlu0 0
  %368 = vperm.xlu0 %367, %v330
  %v369 = vpop.permute.xlu0 %368
  %372 = vset.pattern.permute.xlu0 0
  %373 = vperm.xlu0 %372, %v332
  %v374 = vpop.permute.xlu0 %373
  %v376 = vmul.f32 %v369, %v364
  %v377 = vmul.f32 %v374, %v365
  %v378 = vpack.c.bf16 %v362, %v362
  %v379 = vpack.c.bf16 %v363, %v363
  %v380 = vld [vmem:[%s4] sm:$0xf]
  %v381 = vld [vmem:[%s4 + $0x4] sm:$0xf]
  %v382 = vld [vmem:[%s4 + $0x8] sm:$0xf]
  %v383 = vld [vmem:[%s4 + $0xc] sm:$0xf]
  %v384 = vld [vmem:[%s4 + $0x10] sm:$0xf]
  %v385 = vld [vmem:[%s4 + $0x14] sm:$0xf]
  %v386 = vld [vmem:[%s4 + $0x18] sm:$0xf]
  %v387 = vld [vmem:[%s4 + $0x1c] sm:$0xf]
  %v388 = vld [vmem:[%s4 + $0x20] sm:$0xf]
  %v389 = vld [vmem:[%s4 + $0x24] sm:$0xf]
  %v390 = vld [vmem:[%s4 + $0x28] sm:$0xf]
  %v391 = vld [vmem:[%s4 + $0x2c] sm:$0xf]
  %v392 = vld [vmem:[%s4 + $0x30] sm:$0xf]
  %v393 = vld [vmem:[%s4 + $0x34] sm:$0xf]
  %v394 = vld [vmem:[%s4 + $0x38] sm:$0xf]
  %v395 = vld [vmem:[%s4 + $0x3c] sm:$0xf]
  %v396 = vld [vmem:[%s4 + $0x40] sm:$0xf]
  %v397 = vld [vmem:[%s4 + $0x44] sm:$0xf]
  %v398 = vld [vmem:[%s4 + $0x48] sm:$0xf]
  %v399 = vld [vmem:[%s4 + $0x4c] sm:$0xf]
  %v400 = vld [vmem:[%s4 + $0x50] sm:$0xf]
  %v401 = vld [vmem:[%s4 + $0x54] sm:$0xf]
  %v402 = vld [vmem:[%s4 + $0x58] sm:$0xf]
  %v403 = vld [vmem:[%s4 + $0x5c] sm:$0xf]
  %v404 = vld [vmem:[%s4 + $0x60] sm:$0xf]
  %v405 = vld [vmem:[%s4 + $0x64] sm:$0xf]
  %v406 = vld [vmem:[%s4 + $0x68] sm:$0xf]
  %v407 = vld [vmem:[%s4 + $0x6c] sm:$0xf]
  %v408 = vld [vmem:[%s4 + $0x70] sm:$0xf]
  %v409 = vld [vmem:[%s4 + $0x74] sm:$0xf]
  %v410 = vld [vmem:[%s4 + $0x78] sm:$0xf]
  %v411 = vld [vmem:[%s4 + $0x7c] sm:$0xf]
  %v428 = vunpack.c.l.b16 %v380
  %v429 = vunpack.c.l.b16 %v381
  %v430 = vunpack.c.l.b16 %v382
  %v431 = vunpack.c.l.b16 %v383
  %v432 = vunpack.c.l.b16 %v384
  %v433 = vunpack.c.l.b16 %v385
  %v434 = vunpack.c.l.b16 %v386
  %v435 = vunpack.c.l.b16 %v387
  %v436 = vunpack.c.l.b16 %v388
  %v437 = vunpack.c.l.b16 %v389
  %v438 = vunpack.c.l.b16 %v390
  %v439 = vunpack.c.l.b16 %v391
  %v440 = vunpack.c.l.b16 %v392
  %v441 = vunpack.c.l.b16 %v393
  %v442 = vunpack.c.l.b16 %v394
  %v443 = vunpack.c.l.b16 %v395
  %v444 = vpack.c.b16 %v429, %v428
  %v445 = vpack.c.b16 %v431, %v430
  %v446 = vpack.c.b16 %v433, %v432
  %v447 = vpack.c.b16 %v435, %v434
  %v448 = vpack.c.b16 %v437, %v436
  %v449 = vpack.c.b16 %v439, %v438
  %v450 = vpack.c.b16 %v441, %v440
  %v451 = vpack.c.b16 %v443, %v442
  %460 = vmatprep.subr.bf16.mxu0 0
  %461 = vmatpush1.bf16.msra.mxu0 %v444
  %462 = vmatprep.subr.bf16.mxu0 0
  %463 = vmatpush1.bf16.msra.mxu0 %v445
  %464 = vmatprep.subr.bf16.mxu0 0
  %465 = vmatpush1.bf16.msra.mxu0 %v446
  %466 = vmatprep.subr.bf16.mxu0 0
  %467 = vmatpush1.bf16.msra.mxu0 %v447
  %468 = vmatprep.subr.bf16.mxu0 0
  %469 = vmatpush1.bf16.msra.mxu0 %v448
  %470 = vmatprep.subr.bf16.mxu0 0
  %471 = vmatpush1.bf16.msra.mxu0 %v449
  %472 = vmatprep.subr.bf16.mxu0 0
  %473 = vmatpush1.bf16.msra.mxu0 %v450
  %474 = vmatprep.subr.bf16.mxu0 0
  %475 = vmatpush1.bf16.msra.mxu0 %v451
  %476 = vmatprep.subr.bf16.mxu0 0
  %477 = vmatpush1.bf16.msra.mxu0 0
  %478 = vmatprep.subr.bf16.mxu0 0
  %479 = vmatpush1.bf16.msra.mxu0 0
  %480 = vmatprep.subr.bf16.mxu0 0
  %481 = vmatpush1.bf16.msra.mxu0 0
  %482 = vmatprep.subr.bf16.mxu0 0
  %483 = vmatpush1.bf16.msra.mxu0 0
  %484 = vmatprep.subr.bf16.mxu0 0
  %485 = vmatpush1.bf16.msra.mxu0 0
  %486 = vmatprep.subr.bf16.mxu0 0
  %487 = vmatpush1.bf16.msra.mxu0 0
  %488 = vmatprep.subr.bf16.mxu0 0
  %489 = vmatpush1.bf16.msra.mxu0 0
  %490 = vmatprep.subr.bf16.mxu0 0
  %491 = vmatpush1.bf16.msra.mxu0 0
  %492 = vmatprep.mubr.bf16.mxu0 0
  %493 = vmatmul.mubr.bf16.gmra.mrb[0].mxu0 %v378
  %v494 = vpop.f32.mrb[0].mxu0
  %v495 = vadd.f32 0.0, %v494
  %v496 = vpop.f32.mrb[0].mxu0
  %v497 = vpop.f32.mrb[0].mxu0
  %v498 = vpop.f32.mrb[0].mxu0
  %499 = vdwg.mxu0
  %v516 = vunpack.c.l.b16 %v396
  %v517 = vunpack.c.l.b16 %v397
  %v518 = vunpack.c.l.b16 %v398
  %v519 = vunpack.c.l.b16 %v399
  %v520 = vunpack.c.l.b16 %v400
  %v521 = vunpack.c.l.b16 %v401
  %v522 = vunpack.c.l.b16 %v402
  %v523 = vunpack.c.l.b16 %v403
  %v524 = vunpack.c.l.b16 %v404
  %v525 = vunpack.c.l.b16 %v405
  %v526 = vunpack.c.l.b16 %v406
  %v527 = vunpack.c.l.b16 %v407
  %v528 = vunpack.c.l.b16 %v408
  %v529 = vunpack.c.l.b16 %v409
  %v530 = vunpack.c.l.b16 %v410
  %v531 = vunpack.c.l.b16 %v411
  %v532 = vpack.c.b16 %v517, %v516
  %v533 = vpack.c.b16 %v519, %v518
  %v534 = vpack.c.b16 %v521, %v520
  %v535 = vpack.c.b16 %v523, %v522
  %v536 = vpack.c.b16 %v525, %v524
  %v537 = vpack.c.b16 %v527, %v526
  %v538 = vpack.c.b16 %v529, %v528
  %v539 = vpack.c.b16 %v531, %v530
  %548 = vmatprep.subr.bf16.mxu0 0
  %549 = vmatpush1.bf16.msra.mxu0 %v532
  %550 = vmatprep.subr.bf16.mxu0 0
  %551 = vmatpush1.bf16.msra.mxu0 %v533
  %552 = vmatprep.subr.bf16.mxu0 0
  %553 = vmatpush1.bf16.msra.mxu0 %v534
  %554 = vmatprep.subr.bf16.mxu0 0
  %555 = vmatpush1.bf16.msra.mxu0 %v535
  %556 = vmatprep.subr.bf16.mxu0 0
  %557 = vmatpush1.bf16.msra.mxu0 %v536
  %558 = vmatprep.subr.bf16.mxu0 0
  %559 = vmatpush1.bf16.msra.mxu0 %v537
  %560 = vmatprep.subr.bf16.mxu0 0
  %561 = vmatpush1.bf16.msra.mxu0 %v538
  %562 = vmatprep.subr.bf16.mxu0 0
  %563 = vmatpush1.bf16.msra.mxu0 %v539
  %564 = vmatprep.subr.bf16.mxu0 0
  %565 = vmatpush1.bf16.msra.mxu0 0
  %566 = vmatprep.subr.bf16.mxu0 0
  %567 = vmatpush1.bf16.msra.mxu0 0
  %568 = vmatprep.subr.bf16.mxu0 0
  %569 = vmatpush1.bf16.msra.mxu0 0
  %570 = vmatprep.subr.bf16.mxu0 0
  %571 = vmatpush1.bf16.msra.mxu0 0
  %572 = vmatprep.subr.bf16.mxu0 0
  %573 = vmatpush1.bf16.msra.mxu0 0
  %574 = vmatprep.subr.bf16.mxu0 0
  %575 = vmatpush1.bf16.msra.mxu0 0
  %576 = vmatprep.subr.bf16.mxu0 0
  %577 = vmatpush1.bf16.msra.mxu0 0
  %578 = vmatprep.subr.bf16.mxu0 0
  %579 = vmatpush1.bf16.msra.mxu0 0
  %580 = vmatprep.mubr.bf16.mxu0 0
  %581 = vmatmul.mubr.bf16.gmra.mrb[0].mxu0 %v379
  %v582 = vpop.f32.mrb[0].mxu0
  %v583 = vadd.f32 0.0, %v582
  %v584 = vpop.f32.mrb[0].mxu0
  %v585 = vpop.f32.mrb[0].mxu0
  %v586 = vpop.f32.mrb[0].mxu0
  %587 = vdwg.mxu0
  %v588 = vadd.f32 %v376, %v495
  %v589 = vadd.f32 %v377, %v583
  %590 = vst.msk [vmem:[#allocation4] sm:$0xff] %vm110, %v588
  %591 = vst.msk [vmem:[#allocation4 + $0x8] sm:$0xff] %vm110, %v589
  %592 = vst.msk [vmem:[#allocation2] sm:$0xff] %vm359, %v325
  %593 = vst.msk [vmem:[#allocation2 + $0x8] sm:$0xff] %vm359, %v326
  // Predicated region
  $region26: #{decoder_forward.13} parent=0 // pred_check
    %p594 = pneg %p22
  $region27: #{decoder_forward.13} parent=0 // pred_check_branch
    %596 = sbr.rel (%p594) target = $region29
  $region28: #{decoder_forward.13} parent=0 // pred_region
    %v597 = vld [vmem:[#allocation3] sm:$0xff]
    %v598 = vld [vmem:[#allocation3 + $0x8] sm:$0xff]
    %v599 = vrcp.pop %v597
    %v600 = vrcp.pop %v598
    %v601 = vld [vmem:[#allocation4] sm:$0xff]
    %v602 = vld [vmem:[#allocation4 + $0x8] sm:$0xff]
    %604 = vset.pattern.permute.xlu0 0
    %605 = vperm.xlu0 %604, %v599
    %v606 = vpop.permute.xlu0 %605
    %609 = vset.pattern.permute.xlu0 0
    %610 = vperm.xlu0 %609, %v600
    %v611 = vpop.permute.xlu0 %610
    %v613 = vmul.f32 %v601, %v606
    %v614 = vmul.f32 %v602, %v611
    %616 = vrot.lane.b32.xlu0 %v614, 64
    %v617 = vpop.permute.xlu0 %616
    %v619 = vsel %vm110, %v613, %v617
    %620 = vst [vmem:[%s5] sm:$0xff] %v619
  $region29: #{decoder_forward.13} parent=0 // pred_fallthru
    _
  // Predicated region
  $region30: #{decoder_forward.13} parent=0 // pred_check
    _
  $region31: #{decoder_forward.13} parent=0 // pred_check_branch
    %622 = sbr.rel (0) target = $region33
  $region32: #{decoder_forward.13} parent=0 // pred_region
    _
  $region33: #{decoder_forward.13} parent=0 // pred_fallthru
    _
  // Predicated region
  $region34: #{decoder_forward.13} parent=0 // pred_check
    _
  $region35: #{decoder_forward.13} parent=0 // pred_check_branch
    %624 = sbr.rel (0) target = $region37
  $region36: #{decoder_forward.13} parent=0 // pred_region
    _
  $region37: #{decoder_forward.13} parent=0 // pred_fallthru
    _

</llo_original>
